<compile_context>
chip_gen: v7x
topology: tpu7x:2x2x1
jax: 0.10.0
libtpu: 0.0.40
codegen_flags: <defaults>
</compile_context>

<pallas_src>
import functools

import jax
import jax.numpy as jnp
import numpy as np
from jax import lax
from jax.experimental import pallas as pl
from jax.experimental.pallas import tpu as pltpu

NEG_INF = -1e30  # pad-logit bias -> exp() underflows to exactly 0.0 in f32


# -----------------------------------------------------------------------------
# Pallas kernel
# -----------------------------------------------------------------------------
def deeplog_kernel(x_ref,                       # (S*Bt, I)      bf16, time-major rows
                   wih0_ref, whh0_ref, b0_ref,  # (I,4H)bf16 (H,4H)bf16 (1,4H)f32
                   w1_ref, b1_ref,              # (2H,4H)bf16 (1,4H)f32   fused layer-1
                   wout_ref, bout_ref,          # (H,Opad)bf16 (1,Opad)f32
                   out_ref,                     # (Bt, Opad)     f32
                   xp_ref):                     # (S*Bt, 4H)     f32 VMEM scratch
    Bt = out_ref.shape[0]
    S = x_ref.shape[0] // Bt
    H = whh0_ref.shape[0]
    G = 4 * H

    # Small weights loaded once as values.
    whh0 = whh0_ref[...]
    w1 = w1_ref[...]
    wout = wout_ref[...]

    # --- opt #1: hoisted layer-0 input projection (single big MXU matmul) ----
    # Layer-0 bias is folded in here once, outside the recurrence.
    xp_ref[...] = (jnp.dot(x_ref[...], wih0_ref[...],
                           preferred_element_type=jnp.float32)
                   + b0_ref[...])

    # --- hoisted loop invariants (JAX does not CSE broadcast/iota) -----------
    b1b = jnp.broadcast_to(b1_ref[...], (Bt, G))                 # layer-1 bias
    lane = lax.broadcasted_iota(jnp.int32, (Bt, G), 1)
    g_lane = (lane >= 2 * H) & (lane < 3 * H)                    # tanh 'g' gate lanes

    def gate_act(gates):
        # opt #3: two whole-vreg EUP pushes + one VPU select, then slice.
        # PyTorch gate order [i | f | g | o].
        act = jnp.where(g_lane, jnp.tanh(gates), jax.nn.sigmoid(gates))
        i_g = act[:, 0 * H:1 * H]
        f_g = act[:, 1 * H:2 * H]
        g_g = act[:, 2 * H:3 * H]
        o_g = act[:, 3 * H:4 * H]
        return i_g, f_g, g_g, o_g

    def step(t, carry):
        h0, c0, h1, c1 = carry

        # Layer 0: only the recurrent matmul is on the serial critical path.
        g0 = xp_ref[pl.ds(t * Bt, Bt), :] + jnp.dot(
            h0.astype(whh0.dtype), whh0, preferred_element_type=jnp.float32)
        i0, f0, gg0, o0 = gate_act(g0)
        c0 = f0 * c0 + i0 * gg0
        h0 = o0 * jnp.tanh(c0)

        # Layer 1 (opt #2): single fused gate matmul over [h0_t | h1_{t-1}].
        hcat = jnp.concatenate([h0, h1], axis=-1).astype(w1.dtype)
        g1 = jnp.dot(hcat, w1, preferred_element_type=jnp.float32) + b1b
        i1, f1, gg1, o1 = gate_act(g1)
        c1 = f1 * c1 + i1 * gg1
        h1 = o1 * jnp.tanh(c1)

        return (h0, c0, h1, c1)

    zeros = jnp.zeros((Bt, H), jnp.float32)
    # opt #4: S is small and static -> fully unroll so the scheduler can
    # overlap MXU and EUP work across layers / timesteps.
    _, _, h1, _ = lax.fori_loop(0, S, step, (zeros, zeros, zeros, zeros),
                                unroll=True)

    # Last-timestep Linear + Softmax(dim=1).  Output lanes are padded to a
    # multiple of 128; pad bias is -1e30 so padding carries zero softmax mass.
    logits = (jnp.dot(h1.astype(wout.dtype), wout,
                      preferred_element_type=jnp.float32) + bout_ref[...])
    m = jnp.max(logits, axis=1, keepdims=True)
    e = jnp.exp(logits - m)
    denom = jnp.sum(e, axis=1, keepdims=True)
    out_ref[...] = e * pl.reciprocal(denom, approx=True)


# -----------------------------------------------------------------------------
# Wrapper
# -----------------------------------------------------------------------------
def _pick_batch_tile(batch):
    if batch % 8 == 0:
        for cand in (128, 64, 32, 16, 8):
            if batch % cand == 0:
                return cand
    return batch  # single block == full batch dim (always legal)


@functools.partial(jax.jit, static_argnames=("output_size",))
def deeplog_forward(X, params, *, output_size):
    """X: (seq, batch, input_size) float32, same as the PyTorch forward input."""
    S, B, I = X.shape
    H = params["whh0"].shape[0]
    G = 4 * H
    Opad = params["wout"].shape[1]

    Bt = _pick_batch_tile(B)
    nb = B // Bt

    # Layout plumbing in the wrapper: present each batch block as a contiguous
    # time-major 2-D slab (rows = t*Bt + local_batch) so the kernel does one
    # big input-projection matmul without in-kernel reshapes.
    Xk = (X.astype(jnp.bfloat16)
            .reshape(S, nb, Bt, I)
            .transpose(1, 0, 2, 3)
            .reshape(nb, S * Bt, I))

    out_pad = pl.pallas_call(
        deeplog_kernel,
        out_shape=jax.ShapeDtypeStruct((B, Opad), jnp.float32),
        grid=(nb,),
        in_specs=[
            pl.BlockSpec((None, S * Bt, I), lambda b: (b, 0, 0)),   # X block
            pl.BlockSpec((I, G), lambda b: (0, 0)),                 # wih0
            pl.BlockSpec((H, G), lambda b: (0, 0)),                 # whh0
            pl.BlockSpec((1, G), lambda b: (0, 0)),                 # b0
            pl.BlockSpec((2 * H, G), lambda b: (0, 0)),             # w1 (fused)
            pl.BlockSpec((1, G), lambda b: (0, 0)),                 # b1
            pl.BlockSpec((H, Opad), lambda b: (0, 0)),              # wout (padded)
            pl.BlockSpec((1, Opad), lambda b: (0, 0)),              # bout (padded)
        ],
        out_specs=pl.BlockSpec((Bt, Opad), lambda b: (b, 0)),
        scratch_shapes=[pltpu.VMEM((S * Bt, G), jnp.float32)],       # xproj scratch
        compiler_params=pltpu.CompilerParams(
            dimension_semantics=("parallel",)),
    )(Xk, params["wih0"], params["whh0"], params["b0"],
      params["w1"], params["b1"], params["wout"], params["bout"])

    return out_pad[:, :output_size]


# -----------------------------------------------------------------------------
# Parameters: PyTorch-style init, then packing into the kernel layout
# -----------------------------------------------------------------------------
def init_params(key, input_size, hidden_size, output_size):
    """PyTorch-layout f32 parameters, uniform(-1/sqrt(H), 1/sqrt(H))."""
    H, I, O = hidden_size, input_size, output_size
    k = 1.0 / np.sqrt(H)
    keys = jax.random.split(key, 10)
    u = lambda kk, shape: jax.random.uniform(kk, shape, jnp.float32, -k, k)
    return dict(
        w_ih0=u(keys[0], (4 * H, I)), w_hh0=u(keys[1], (4 * H, H)),
        b_ih0=u(keys[2], (4 * H,)),   b_hh0=u(keys[3], (4 * H,)),
        w_ih1=u(keys[4], (4 * H, H)), w_hh1=u(keys[5], (4 * H, H)),
        b_ih1=u(keys[6], (4 * H,)),   b_hh1=u(keys[7], (4 * H,)),
        w_out=u(keys[8], (O, H)),     b_out=u(keys[9], (O,)),
    )


def pack_params(p, hidden_size, output_size):
    """Transpose, fuse layer-1 weights, pad output lanes, cast weights to bf16."""
    H, O = hidden_size, output_size
    Opad = ((O + 127) // 128) * 128
    wout_t = p["w_out"].T                                           # (H, O)
    wout_pad = jnp.pad(wout_t, ((0, 0), (0, Opad - O)))
    bout_pad = jnp.pad(p["b_out"].reshape(1, O), ((0, 0), (0, Opad - O)),
                       constant_values=NEG_INF)
    return dict(
        wih0=p["w_ih0"].T.astype(jnp.bfloat16),                     # (I, 4H)
        whh0=p["w_hh0"].T.astype(jnp.bfloat16),                     # (H, 4H)
        b0=(p["b_ih0"] + p["b_hh0"]).reshape(1, 4 * H).astype(jnp.float32),
        w1=jnp.concatenate([p["w_ih1"].T, p["w_hh1"].T],
                           axis=0).astype(jnp.bfloat16),            # (2H, 4H)
        b1=(p["b_ih1"] + p["b_hh1"]).reshape(1, 4 * H).astype(jnp.float32),
        wout=wout_pad.astype(jnp.bfloat16),                         # (H, Opad)
        bout=bout_pad.astype(jnp.float32),                          # (1, Opad)
    )


# -----------------------------------------------------------------------------
# Pure-JAX reference (same bf16 matmul precision, exact softmax divide)
# -----------------------------------------------------------------------------
def deeplog_reference(X, kp, output_size):
    S, B, I = X.shape
    H = kp["whh0"].shape[0]
    xb = X.astype(jnp.bfloat16)

    def act_split(g):
        i = jax.nn.sigmoid(g[:, 0 * H:1 * H])
        f = jax.nn.sigmoid(g[:, 1 * H:2 * H])
        gg = jnp.tanh(g[:, 2 * H:3 * H])
        o = jax.nn.sigmoid(g[:, 3 * H:4 * H])
        return i, f, gg, o

    def scan_fn(carry, x_t):
        h0, c0, h1, c1 = carry
        g0 = (jnp.dot(x_t, kp["wih0"], preferred_element_type=jnp.float32)
              + kp["b0"]
              + jnp.dot(h0.astype(jnp.bfloat16), kp["whh0"],
                        preferred_element_type=jnp.float32))
        i0, f0, gg0, o0 = act_split(g0)
        c0 = f0 * c0 + i0 * gg0
        h0 = o0 * jnp.tanh(c0)
        hcat = jnp.concatenate([h0, h1], axis=-1).astype(jnp.bfloat16)
        g1 = jnp.dot(hcat, kp["w1"], preferred_element_type=jnp.float32) + kp["b1"]
        i1, f1, gg1, o1 = act_split(g1)
        c1 = f1 * c1 + i1 * gg1
        h1 = o1 * jnp.tanh(c1)
        return (h0, c0, h1, c1), None

    z = jnp.zeros((B, H), jnp.float32)
    (_, _, h1, _), _ = lax.scan(scan_fn, (z, z, z, z), xb)
    logits = (jnp.dot(h1.astype(jnp.bfloat16), kp["wout"],
                      preferred_element_type=jnp.float32) + kp["bout"])
    probs = jax.nn.softmax(logits, axis=1)
    return probs[:, :output_size]


if __name__ == "__main__":
    # Small shapes consistent with the module: X is (seq, batch, input_size).
    seq, batch = 8, 2
    input_size, hidden_size, output_size = 16, 32, 16

    key = jax.random.PRNGKey(0)
    kx, kparam = jax.random.split(key)
    X = jax.random.normal(kx, (seq, batch, input_size), dtype=jnp.float32)
    raw = init_params(kparam, input_size, hidden_size, output_size)
    packed = pack_params(raw, hidden_size, output_size)

    out = deeplog_forward(X, packed, output_size=output_size)
    out = jax.block_until_ready(out)

    ref = jax.block_until_ready(deeplog_reference(X, packed, output_size))
    np.testing.assert_allclose(np.asarray(out), np.asarray(ref),
                               rtol=5e-3, atol=5e-3)
    # Softmax rows sum to ~1 (approx reciprocal tolerance).
    np.testing.assert_allclose(np.asarray(out).sum(axis=1), np.ones(batch),
                               rtol=0, atol=5e-3)

    print("KERNEL_OK")
</pallas_src>

<mosaic_0001>
module attributes {stable_mosaic.version = 11 : i64} {
  func.func @deeplog_kernel(%arg0: i32, %arg1: memref<1x16x16xbf16, #tpu.memory_space<vmem>>, %arg2: memref<16x128xbf16, #tpu.memory_space<vmem>>, %arg3: memref<32x128xbf16, #tpu.memory_space<vmem>>, %arg4: memref<1x128xf32, #tpu.memory_space<vmem>>, %arg5: memref<64x128xbf16, #tpu.memory_space<vmem>>, %arg6: memref<1x128xf32, #tpu.memory_space<vmem>>, %arg7: memref<32x128xbf16, #tpu.memory_space<vmem>>, %arg8: memref<1x128xf32, #tpu.memory_space<vmem>>, %arg9: memref<2x128xf32, #tpu.memory_space<vmem>>, %arg10: memref<16x128xf32, #tpu.memory_space<vmem>>) attributes {dimension_semantics = [#tpu.dimension_semantics<parallel>], iteration_bounds = array<i64: 1>, scalar_prefetch = 0 : i64, scratch_operands = 1 : i64, tpu.core_type = #tpu.core_type<tc>, window_params = [{transform_indices = @transform_0, window_bounds = array<i64: 1, 16, 16>}, {pipeline_mode = #tpu.pipeline_mode<synchronous>, transform_indices = @transform_1, window_bounds = array<i64: 16, 128>}, {pipeline_mode = #tpu.pipeline_mode<synchronous>, transform_indices = @transform_2, window_bounds = array<i64: 32, 128>}, {pipeline_mode = #tpu.pipeline_mode<synchronous>, transform_indices = @transform_3, window_bounds = array<i64: 1, 128>}, {pipeline_mode = #tpu.pipeline_mode<synchronous>, transform_indices = @transform_4, window_bounds = array<i64: 64, 128>}, {pipeline_mode = #tpu.pipeline_mode<synchronous>, transform_indices = @transform_5, window_bounds = array<i64: 1, 128>}, {pipeline_mode = #tpu.pipeline_mode<synchronous>, transform_indices = @transform_6, window_bounds = array<i64: 32, 128>}, {pipeline_mode = #tpu.pipeline_mode<synchronous>, transform_indices = @transform_7, window_bounds = array<i64: 1, 128>}, {transform_indices = @transform_8, window_bounds = array<i64: 2, 128>}]} {
    %c0 = arith.constant 0 : index
    %c0_0 = arith.constant 0 : index
    %0 = vector.load %arg3[%c0, %c0_0] : memref<32x128xbf16, #tpu.memory_space<vmem>>, vector<32x128xbf16>
    %c0_1 = arith.constant 0 : index
    %c0_2 = arith.constant 0 : index
    %1 = vector.load %arg5[%c0_1, %c0_2] : memref<64x128xbf16, #tpu.memory_space<vmem>>, vector<64x128xbf16>
    %c0_3 = arith.constant 0 : index
    %c0_4 = arith.constant 0 : index
    %2 = vector.load %arg7[%c0_3, %c0_4] : memref<32x128xbf16, #tpu.memory_space<vmem>>, vector<32x128xbf16>
    %c0_5 = arith.constant 0 : index
    %c0_6 = arith.constant 0 : index
    %c0_7 = arith.constant 0 : index
    %3 = vector.load %arg1[%c0_5, %c0_6, %c0_7] : memref<1x16x16xbf16, #tpu.memory_space<vmem>>, vector<1x16x16xbf16>
    %4 = vector.shape_cast %3 : vector<1x16x16xbf16> to vector<16x16xbf16>
    %c0_8 = arith.constant 0 : index
    %c0_9 = arith.constant 0 : index
    %5 = vector.load %arg2[%c0_8, %c0_9] : memref<16x128xbf16, #tpu.memory_space<vmem>>, vector<16x128xbf16>
    %cst = arith.constant dense<0.000000e+00> : vector<16x128xf32>
    %6 = tpu.matmul %4, %5, %cst {dimension_numbers = #tpu.dot_dimension_numbers<[1], [0], [0], [1], [0, 0, 1, 1], [], []>} : vector<16x16xbf16>, vector<16x128xbf16>, vector<16x128xf32> -> vector<16x128xf32>
    %c0_10 = arith.constant 0 : index
    %c0_11 = arith.constant 0 : index
    %7 = vector.load %arg4[%c0_10, %c0_11] : memref<1x128xf32, #tpu.memory_space<vmem>>, vector<1x128xf32>
    %8 = vector.broadcast %7 : vector<1x128xf32> to vector<16x128xf32>
    %9 = arith.addf %6, %8 : vector<16x128xf32>
    %c0_12 = arith.constant 0 : index
    %c0_13 = arith.constant 0 : index
    %10 = vector.load %arg10[%c0_12, %c0_13] : memref<16x128xf32, #tpu.memory_space<vmem>>, vector<16x128xf32>
    tpu.vector_store %arg10[%c0_12, %c0_13], %9 {strides = array<i32>} : memref<16x128xf32, #tpu.memory_space<vmem>>, vector<16x128xf32>,
    %c0_14 = arith.constant 0 : index
    %c0_15 = arith.constant 0 : index
    %11 = vector.load %arg6[%c0_14, %c0_15] : memref<1x128xf32, #tpu.memory_space<vmem>>, vector<1x128xf32>
    %12 = vector.shape_cast %11 : vector<1x128xf32> to vector<1x128xf32>
    %13 = vector.broadcast %12 : vector<1x128xf32> to vector<2x128xf32>
    %14 = tpu.iota {dimensions = array<i32: 1>} : vector<2x128xi32>
    %c64_i32 = arith.constant 64 : i32
    %15 = vector.broadcast %c64_i32 : i32 to vector<2x128xi32>
    %16 = arith.cmpi sge, %14, %15 : vector<2x128xi32>
    %c96_i32 = arith.constant 96 : i32
    %17 = vector.broadcast %c96_i32 : i32 to vector<2x128xi32>
    %18 = arith.cmpi slt, %14, %17 : vector<2x128xi32>
    %19 = arith.andi %16, %18 : vector<2x128xi1>
    %cst_16 = arith.constant 0.000000e+00 : f32
    %20 = vector.broadcast %cst_16 : f32 to vector<2x32xf32>
    %c0_i32 = arith.constant 0 : i32
    %c2_i32 = arith.constant 2 : i32
    %21 = arith.muli %c0_i32, %c2_i32 : i32
    %22 = arith.index_cast %21 : i32 to index
    %c0_17 = arith.constant 0 : index
    %23 = vector.load %arg10[%22, %c0_17] : memref<16x128xf32, #tpu.memory_space<vmem>>, vector<2x128xf32>
    %24 = arith.truncf %20 : vector<2x32xf32> to vector<2x32xbf16>
    %cst_18 = arith.constant dense<0.000000e+00> : vector<2x128xf32>
    %25 = tpu.matmul %24, %0, %cst_18 {dimension_numbers = #tpu.dot_dimension_numbers<[1], [0], [0], [1], [0, 0, 1, 1], [], []>} : vector<2x32xbf16>, vector<32x128xbf16>, vector<2x128xf32> -> vector<2x128xf32>
    %26 = arith.addf %23, %25 : vector<2x128xf32>
    %27 = math.tanh %26 : vector<2x128xf32>
    %28 = arith.negf %26 : vector<2x128xf32>
    %29 = math.exp %28 : vector<2x128xf32>
    %cst_19 = arith.constant 1.000000e+00 : f32
    %30 = vector.broadcast %cst_19 : f32 to vector<2x128xf32>
    %31 = arith.addf %30, %29 : vector<2x128xf32>
    %32 = arith.divf %30, %31 : vector<2x128xf32>
    %33 = arith.select %19, %27, %32 : vector<2x128xi1>, vector<2x128xf32>
    %34 = vector.extract_strided_slice %33 {offsets = [0, 0], sizes = [2, 32], strides = [1, 1]} : vector<2x128xf32> to vector<2x32xf32>
    %35 = vector.extract_strided_slice %33 {offsets = [0, 32], sizes = [2, 32], strides = [1, 1]} : vector<2x128xf32> to vector<2x32xf32>
    %36 = vector.extract_strided_slice %33 {offsets = [0, 64], sizes = [2, 32], strides = [1, 1]} : vector<2x128xf32> to vector<2x32xf32>
    %37 = vector.extract_strided_slice %33 {offsets = [0, 96], sizes = [2, 32], strides = [1, 1]} : vector<2x128xf32> to vector<2x32xf32>
    %38 = arith.mulf %35, %20 : vector<2x32xf32>
    %39 = arith.mulf %34, %36 : vector<2x32xf32>
    %40 = arith.addf %38, %39 : vector<2x32xf32>
    %41 = math.tanh %40 : vector<2x32xf32>
    %42 = arith.mulf %37, %41 : vector<2x32xf32>
    %43 = tpu.concatenate %42, %20 in 1 : vector<2x32xf32>, vector<2x32xf32> -> vector<2x64xf32>
    %44 = arith.truncf %43 : vector<2x64xf32> to vector<2x64xbf16>
    %cst_20 = arith.constant dense<0.000000e+00> : vector<2x128xf32>
    %45 = tpu.matmul %44, %1, %cst_20 {dimension_numbers = #tpu.dot_dimension_numbers<[1], [0], [0], [1], [0, 0, 1, 1], [], []>} : vector<2x64xbf16>, vector<64x128xbf16>, vector<2x128xf32> -> vector<2x128xf32>
    %46 = arith.addf %45, %13 : vector<2x128xf32>
    %47 = math.tanh %46 : vector<2x128xf32>
    %48 = arith.negf %46 : vector<2x128xf32>
    %49 = math.exp %48 : vector<2x128xf32>
    %cst_21 = arith.constant 1.000000e+00 : f32
    %50 = vector.broadcast %cst_21 : f32 to vector<2x128xf32>
    %51 = arith.addf %50, %49 : vector<2x128xf32>
    %52 = arith.divf %50, %51 : vector<2x128xf32>
    %53 = arith.select %19, %47, %52 : vector<2x128xi1>, vector<2x128xf32>
    %54 = vector.extract_strided_slice %53 {offsets = [0, 0], sizes = [2, 32], strides = [1, 1]} : vector<2x128xf32> to vector<2x32xf32>
    %55 = vector.extract_strided_slice %53 {offsets = [0, 32], sizes = [2, 32], strides = [1, 1]} : vector<2x128xf32> to vector<2x32xf32>
    %56 = vector.extract_strided_slice %53 {offsets = [0, 64], sizes = [2, 32], strides = [1, 1]} : vector<2x128xf32> to vector<2x32xf32>
    %57 = vector.extract_strided_slice %53 {offsets = [0, 96], sizes = [2, 32], strides = [1, 1]} : vector<2x128xf32> to vector<2x32xf32>
    %58 = arith.mulf %55, %20 : vector<2x32xf32>
    %59 = arith.mulf %54, %56 : vector<2x32xf32>
    %60 = arith.addf %58, %59 : vector<2x32xf32>
    %61 = math.tanh %60 : vector<2x32xf32>
    %62 = arith.mulf %57, %61 : vector<2x32xf32>
    %c1_i32 = arith.constant 1 : i32
    %c2_i32_22 = arith.constant 2 : i32
    %63 = arith.muli %c1_i32, %c2_i32_22 : i32
    %64 = arith.index_cast %63 : i32 to index
    %c0_23 = arith.constant 0 : index
    %65 = vector.load %arg10[%64, %c0_23] : memref<16x128xf32, #tpu.memory_space<vmem>>, vector<2x128xf32>
    %66 = arith.truncf %42 : vector<2x32xf32> to vector<2x32xbf16>
    %cst_24 = arith.constant dense<0.000000e+00> : vector<2x128xf32>
    %67 = tpu.matmul %66, %0, %cst_24 {dimension_numbers = #tpu.dot_dimension_numbers<[1], [0], [0], [1], [0, 0, 1, 1], [], []>} : vector<2x32xbf16>, vector<32x128xbf16>, vector<2x128xf32> -> vector<2x128xf32>
    %68 = arith.addf %65, %67 : vector<2x128xf32>
    %69 = math.tanh %68 : vector<2x128xf32>
    %70 = arith.negf %68 : vector<2x128xf32>
    %71 = math.exp %70 : vector<2x128xf32>
    %cst_25 = arith.constant 1.000000e+00 : f32
    %72 = vector.broadcast %cst_25 : f32 to vector<2x128xf32>
    %73 = arith.addf %72, %71 : vector<2x128xf32>
    %74 = arith.divf %72, %73 : vector<2x128xf32>
    %75 = arith.select %19, %69, %74 : vector<2x128xi1>, vector<2x128xf32>
    %76 = vector.extract_strided_slice %75 {offsets = [0, 0], sizes = [2, 32], strides = [1, 1]} : vector<2x128xf32> to vector<2x32xf32>
    %77 = vector.extract_strided_slice %75 {offsets = [0, 32], sizes = [2, 32], strides = [1, 1]} : vector<2x128xf32> to vector<2x32xf32>
    %78 = vector.extract_strided_slice %75 {offsets = [0, 64], sizes = [2, 32], strides = [1, 1]} : vector<2x128xf32> to vector<2x32xf32>
    %79 = vector.extract_strided_slice %75 {offsets = [0, 96], sizes = [2, 32], strides = [1, 1]} : vector<2x128xf32> to vector<2x32xf32>
    %80 = arith.mulf %77, %40 : vector<2x32xf32>
    %81 = arith.mulf %76, %78 : vector<2x32xf32>
    %82 = arith.addf %80, %81 : vector<2x32xf32>
    %83 = math.tanh %82 : vector<2x32xf32>
    %84 = arith.mulf %79, %83 : vector<2x32xf32>
    %85 = tpu.concatenate %84, %62 in 1 : vector<2x32xf32>, vector<2x32xf32> -> vector<2x64xf32>
    %86 = arith.truncf %85 : vector<2x64xf32> to vector<2x64xbf16>
    %cst_26 = arith.constant dense<0.000000e+00> : vector<2x128xf32>
    %87 = tpu.matmul %86, %1, %cst_26 {dimension_numbers = #tpu.dot_dimension_numbers<[1], [0], [0], [1], [0, 0, 1, 1], [], []>} : vector<2x64xbf16>, vector<64x128xbf16>, vector<2x128xf32> -> vector<2x128xf32>
    %88 = arith.addf %87, %13 : vector<2x128xf32>
    %89 = math.tanh %88 : vector<2x128xf32>
    %90 = arith.negf %88 : vector<2x128xf32>
    %91 = math.exp %90 : vector<2x128xf32>
    %cst_27 = arith.constant 1.000000e+00 : f32
    %92 = vector.broadcast %cst_27 : f32 to vector<2x128xf32>
    %93 = arith.addf %92, %91 : vector<2x128xf32>
    %94 = arith.divf %92, %93 : vector<2x128xf32>
    %95 = arith.select %19, %89, %94 : vector<2x128xi1>, vector<2x128xf32>
    %96 = vector.extract_strided_slice %95 {offsets = [0, 0], sizes = [2, 32], strides = [1, 1]} : vector<2x128xf32> to vector<2x32xf32>
    %97 = vector.extract_strided_slice %95 {offsets = [0, 32], sizes = [2, 32], strides = [1, 1]} : vector<2x128xf32> to vector<2x32xf32>
    %98 = vector.extract_strided_slice %95 {offsets = [0, 64], sizes = [2, 32], strides = [1, 1]} : vector<2x128xf32> to vector<2x32xf32>
    %99 = vector.extract_strided_slice %95 {offsets = [0, 96], sizes = [2, 32], strides = [1, 1]} : vector<2x128xf32> to vector<2x32xf32>
    %100 = arith.mulf %97, %60 : vector<2x32xf32>
    %101 = arith.mulf %96, %98 : vector<2x32xf32>
    %102 = arith.addf %100, %101 : vector<2x32xf32>
    %103 = math.tanh %102 : vector<2x32xf32>
    %104 = arith.mulf %99, %103 : vector<2x32xf32>
    %c2_i32_28 = arith.constant 2 : i32
    %c2_i32_29 = arith.constant 2 : i32
    %105 = arith.muli %c2_i32_28, %c2_i32_29 : i32
    %106 = arith.index_cast %105 : i32 to index
    %c0_30 = arith.constant 0 : index
    %107 = vector.load %arg10[%106, %c0_30] : memref<16x128xf32, #tpu.memory_space<vmem>>, vector<2x128xf32>
    %108 = arith.truncf %84 : vector<2x32xf32> to vector<2x32xbf16>
    %cst_31 = arith.constant dense<0.000000e+00> : vector<2x128xf32>
    %109 = tpu.matmul %108, %0, %cst_31 {dimension_numbers = #tpu.dot_dimension_numbers<[1], [0], [0], [1], [0, 0, 1, 1], [], []>} : vector<2x32xbf16>, vector<32x128xbf16>, vector<2x128xf32> -> vector<2x128xf32>
    %110 = arith.addf %107, %109 : vector<2x128xf32>
    %111 = math.tanh %110 : vector<2x128xf32>
    %112 = arith.negf %110 : vector<2x128xf32>
    %113 = math.exp %112 : vector<2x128xf32>
    %cst_32 = arith.constant 1.000000e+00 : f32
    %114 = vector.broadcast %cst_32 : f32 to vector<2x128xf32>
    %115 = arith.addf %114, %113 : vector<2x128xf32>
    %116 = arith.divf %114, %115 : vector<2x128xf32>
    %117 = arith.select %19, %111, %116 : vector<2x128xi1>, vector<2x128xf32>
    %118 = vector.extract_strided_slice %117 {offsets = [0, 0], sizes = [2, 32], strides = [1, 1]} : vector<2x128xf32> to vector<2x32xf32>
    %119 = vector.extract_strided_slice %117 {offsets = [0, 32], sizes = [2, 32], strides = [1, 1]} : vector<2x128xf32> to vector<2x32xf32>
    %120 = vector.extract_strided_slice %117 {offsets = [0, 64], sizes = [2, 32], strides = [1, 1]} : vector<2x128xf32> to vector<2x32xf32>
    %121 = vector.extract_strided_slice %117 {offsets = [0, 96], sizes = [2, 32], strides = [1, 1]} : vector<2x128xf32> to vector<2x32xf32>
    %122 = arith.mulf %119, %82 : vector<2x32xf32>
    %123 = arith.mulf %118, %120 : vector<2x32xf32>
    %124 = arith.addf %122, %123 : vector<2x32xf32>
    %125 = math.tanh %124 : vector<2x32xf32>
    %126 = arith.mulf %121, %125 : vector<2x32xf32>
    %127 = tpu.concatenate %126, %104 in 1 : vector<2x32xf32>, vector<2x32xf32> -> vector<2x64xf32>
    %128 = arith.truncf %127 : vector<2x64xf32> to vector<2x64xbf16>
    %cst_33 = arith.constant dense<0.000000e+00> : vector<2x128xf32>
    %129 = tpu.matmul %128, %1, %cst_33 {dimension_numbers = #tpu.dot_dimension_numbers<[1], [0], [0], [1], [0, 0, 1, 1], [], []>} : vector<2x64xbf16>, vector<64x128xbf16>, vector<2x128xf32> -> vector<2x128xf32>
    %130 = arith.addf %129, %13 : vector<2x128xf32>
    %131 = math.tanh %130 : vector<2x128xf32>
    %132 = arith.negf %130 : vector<2x128xf32>
    %133 = math.exp %132 : vector<2x128xf32>
    %cst_34 = arith.constant 1.000000e+00 : f32
    %134 = vector.broadcast %cst_34 : f32 to vector<2x128xf32>
    %135 = arith.addf %134, %133 : vector<2x128xf32>
    %136 = arith.divf %134, %135 : vector<2x128xf32>
    %137 = arith.select %19, %131, %136 : vector<2x128xi1>, vector<2x128xf32>
    %138 = vector.extract_strided_slice %137 {offsets = [0, 0], sizes = [2, 32], strides = [1, 1]} : vector<2x128xf32> to vector<2x32xf32>
    %139 = vector.extract_strided_slice %137 {offsets = [0, 32], sizes = [2, 32], strides = [1, 1]} : vector<2x128xf32> to vector<2x32xf32>
    %140 = vector.extract_strided_slice %137 {offsets = [0, 64], sizes = [2, 32], strides = [1, 1]} : vector<2x128xf32> to vector<2x32xf32>
    %141 = vector.extract_strided_slice %137 {offsets = [0, 96], sizes = [2, 32], strides = [1, 1]} : vector<2x128xf32> to vector<2x32xf32>
    %142 = arith.mulf %139, %102 : vector<2x32xf32>
    %143 = arith.mulf %138, %140 : vector<2x32xf32>
    %144 = arith.addf %142, %143 : vector<2x32xf32>
    %145 = math.tanh %144 : vector<2x32xf32>
    %146 = arith.mulf %141, %145 : vector<2x32xf32>
    %c3_i32 = arith.constant 3 : i32
    %c2_i32_35 = arith.constant 2 : i32
    %147 = arith.muli %c3_i32, %c2_i32_35 : i32
    %148 = arith.index_cast %147 : i32 to index
    %c0_36 = arith.constant 0 : index
    %149 = vector.load %arg10[%148, %c0_36] : memref<16x128xf32, #tpu.memory_space<vmem>>, vector<2x128xf32>
    %150 = arith.truncf %126 : vector<2x32xf32> to vector<2x32xbf16>
    %cst_37 = arith.constant dense<0.000000e+00> : vector<2x128xf32>
    %151 = tpu.matmul %150, %0, %cst_37 {dimension_numbers = #tpu.dot_dimension_numbers<[1], [0], [0], [1], [0, 0, 1, 1], [], []>} : vector<2x32xbf16>, vector<32x128xbf16>, vector<2x128xf32> -> vector<2x128xf32>
    %152 = arith.addf %149, %151 : vector<2x128xf32>
    %153 = math.tanh %152 : vector<2x128xf32>
    %154 = arith.negf %152 : vector<2x128xf32>
    %155 = math.exp %154 : vector<2x128xf32>
    %cst_38 = arith.constant 1.000000e+00 : f32
    %156 = vector.broadcast %cst_38 : f32 to vector<2x128xf32>
    %157 = arith.addf %156, %155 : vector<2x128xf32>
    %158 = arith.divf %156, %157 : vector<2x128xf32>
    %159 = arith.select %19, %153, %158 : vector<2x128xi1>, vector<2x128xf32>
    %160 = vector.extract_strided_slice %159 {offsets = [0, 0], sizes = [2, 32], strides = [1, 1]} : vector<2x128xf32> to vector<2x32xf32>
    %161 = vector.extract_strided_slice %159 {offsets = [0, 32], sizes = [2, 32], strides = [1, 1]} : vector<2x128xf32> to vector<2x32xf32>
    %162 = vector.extract_strided_slice %159 {offsets = [0, 64], sizes = [2, 32], strides = [1, 1]} : vector<2x128xf32> to vector<2x32xf32>
    %163 = vector.extract_strided_slice %159 {offsets = [0, 96], sizes = [2, 32], strides = [1, 1]} : vector<2x128xf32> to vector<2x32xf32>
    %164 = arith.mulf %161, %124 : vector<2x32xf32>
    %165 = arith.mulf %160, %162 : vector<2x32xf32>
    %166 = arith.addf %164, %165 : vector<2x32xf32>
    %167 = math.tanh %166 : vector<2x32xf32>
    %168 = arith.mulf %163, %167 : vector<2x32xf32>
    %169 = tpu.concatenate %168, %146 in 1 : vector<2x32xf32>, vector<2x32xf32> -> vector<2x64xf32>
    %170 = arith.truncf %169 : vector<2x64xf32> to vector<2x64xbf16>
    %cst_39 = arith.constant dense<0.000000e+00> : vector<2x128xf32>
    %171 = tpu.matmul %170, %1, %cst_39 {dimension_numbers = #tpu.dot_dimension_numbers<[1], [0], [0], [1], [0, 0, 1, 1], [], []>} : vector<2x64xbf16>, vector<64x128xbf16>, vector<2x128xf32> -> vector<2x128xf32>
    %172 = arith.addf %171, %13 : vector<2x128xf32>
    %173 = math.tanh %172 : vector<2x128xf32>
    %174 = arith.negf %172 : vector<2x128xf32>
    %175 = math.exp %174 : vector<2x128xf32>
    %cst_40 = arith.constant 1.000000e+00 : f32
    %176 = vector.broadcast %cst_40 : f32 to vector<2x128xf32>
    %177 = arith.addf %176, %175 : vector<2x128xf32>
    %178 = arith.divf %176, %177 : vector<2x128xf32>
    %179 = arith.select %19, %173, %178 : vector<2x128xi1>, vector<2x128xf32>
    %180 = vector.extract_strided_slice %179 {offsets = [0, 0], sizes = [2, 32], strides = [1, 1]} : vector<2x128xf32> to vector<2x32xf32>
    %181 = vector.extract_strided_slice %179 {offsets = [0, 32], sizes = [2, 32], strides = [1, 1]} : vector<2x128xf32> to vector<2x32xf32>
    %182 = vector.extract_strided_slice %179 {offsets = [0, 64], sizes = [2, 32], strides = [1, 1]} : vector<2x128xf32> to vector<2x32xf32>
    %183 = vector.extract_strided_slice %179 {offsets = [0, 96], sizes = [2, 32], strides = [1, 1]} : vector<2x128xf32> to vector<2x32xf32>
    %184 = arith.mulf %181, %144 : vector<2x32xf32>
    %185 = arith.mulf %180, %182 : vector<2x32xf32>
    %186 = arith.addf %184, %185 : vector<2x32xf32>
    %187 = math.tanh %186 : vector<2x32xf32>
    %188 = arith.mulf %183, %187 : vector<2x32xf32>
    %c4_i32 = arith.constant 4 : i32
    %c2_i32_41 = arith.constant 2 : i32
    %189 = arith.muli %c4_i32, %c2_i32_41 : i32
    %190 = arith.index_cast %189 : i32 to index
    %c0_42 = arith.constant 0 : index
    %191 = vector.load %arg10[%190, %c0_42] : memref<16x128xf32, #tpu.memory_space<vmem>>, vector<2x128xf32>
    %192 = arith.truncf %168 : vector<2x32xf32> to vector<2x32xbf16>
    %cst_43 = arith.constant dense<0.000000e+00> : vector<2x128xf32>
    %193 = tpu.matmul %192, %0, %cst_43 {dimension_numbers = #tpu.dot_dimension_numbers<[1], [0], [0], [1], [0, 0, 1, 1], [], []>} : vector<2x32xbf16>, vector<32x128xbf16>, vector<2x128xf32> -> vector<2x128xf32>
    %194 = arith.addf %191, %193 : vector<2x128xf32>
    %195 = math.tanh %194 : vector<2x128xf32>
    %196 = arith.negf %194 : vector<2x128xf32>
    %197 = math.exp %196 : vector<2x128xf32>
    %cst_44 = arith.constant 1.000000e+00 : f32
    %198 = vector.broadcast %cst_44 : f32 to vector<2x128xf32>
    %199 = arith.addf %198, %197 : vector<2x128xf32>
    %200 = arith.divf %198, %199 : vector<2x128xf32>
    %201 = arith.select %19, %195, %200 : vector<2x128xi1>, vector<2x128xf32>
    %202 = vector.extract_strided_slice %201 {offsets = [0, 0], sizes = [2, 32], strides = [1, 1]} : vector<2x128xf32> to vector<2x32xf32>
    %203 = vector.extract_strided_slice %201 {offsets = [0, 32], sizes = [2, 32], strides = [1, 1]} : vector<2x128xf32> to vector<2x32xf32>
    %204 = vector.extract_strided_slice %201 {offsets = [0, 64], sizes = [2, 32], strides = [1, 1]} : vector<2x128xf32> to vector<2x32xf32>
    %205 = vector.extract_strided_slice %201 {offsets = [0, 96], sizes = [2, 32], strides = [1, 1]} : vector<2x128xf32> to vector<2x32xf32>
    %206 = arith.mulf %203, %166 : vector<2x32xf32>
    %207 = arith.mulf %202, %204 : vector<2x32xf32>
    %208 = arith.addf %206, %207 : vector<2x32xf32>
    %209 = math.tanh %208 : vector<2x32xf32>
    %210 = arith.mulf %205, %209 : vector<2x32xf32>
    %211 = tpu.concatenate %210, %188 in 1 : vector<2x32xf32>, vector<2x32xf32> -> vector<2x64xf32>
    %212 = arith.truncf %211 : vector<2x64xf32> to vector<2x64xbf16>
    %cst_45 = arith.constant dense<0.000000e+00> : vector<2x128xf32>
    %213 = tpu.matmul %212, %1, %cst_45 {dimension_numbers = #tpu.dot_dimension_numbers<[1], [0], [0], [1], [0, 0, 1, 1], [], []>} : vector<2x64xbf16>, vector<64x128xbf16>, vector<2x128xf32> -> vector<2x128xf32>
    %214 = arith.addf %213, %13 : vector<2x128xf32>
    %215 = math.tanh %214 : vector<2x128xf32>
    %216 = arith.negf %214 : vector<2x128xf32>
    %217 = math.exp %216 : vector<2x128xf32>
    %cst_46 = arith.constant 1.000000e+00 : f32
    %218 = vector.broadcast %cst_46 : f32 to vector<2x128xf32>
    %219 = arith.addf %218, %217 : vector<2x128xf32>
    %220 = arith.divf %218, %219 : vector<2x128xf32>
    %221 = arith.select %19, %215, %220 : vector<2x128xi1>, vector<2x128xf32>
    %222 = vector.extract_strided_slice %221 {offsets = [0, 0], sizes = [2, 32], strides = [1, 1]} : vector<2x128xf32> to vector<2x32xf32>
    %223 = vector.extract_strided_slice %221 {offsets = [0, 32], sizes = [2, 32], strides = [1, 1]} : vector<2x128xf32> to vector<2x32xf32>
    %224 = vector.extract_strided_slice %221 {offsets = [0, 64], sizes = [2, 32], strides = [1, 1]} : vector<2x128xf32> to vector<2x32xf32>
    %225 = vector.extract_strided_slice %221 {offsets = [0, 96], sizes = [2, 32], strides = [1, 1]} : vector<2x128xf32> to vector<2x32xf32>
    %226 = arith.mulf %223, %186 : vector<2x32xf32>
    %227 = arith.mulf %222, %224 : vector<2x32xf32>
    %228 = arith.addf %226, %227 : vector<2x32xf32>
    %229 = math.tanh %228 : vector<2x32xf32>
    %230 = arith.mulf %225, %229 : vector<2x32xf32>
    %c5_i32 = arith.constant 5 : i32
    %c2_i32_47 = arith.constant 2 : i32
    %231 = arith.muli %c5_i32, %c2_i32_47 : i32
    %232 = arith.index_cast %231 : i32 to index
    %c0_48 = arith.constant 0 : index
    %233 = vector.load %arg10[%232, %c0_48] : memref<16x128xf32, #tpu.memory_space<vmem>>, vector<2x128xf32>
    %234 = arith.truncf %210 : vector<2x32xf32> to vector<2x32xbf16>
    %cst_49 = arith.constant dense<0.000000e+00> : vector<2x128xf32>
    %235 = tpu.matmul %234, %0, %cst_49 {dimension_numbers = #tpu.dot_dimension_numbers<[1], [0], [0], [1], [0, 0, 1, 1], [], []>} : vector<2x32xbf16>, vector<32x128xbf16>, vector<2x128xf32> -> vector<2x128xf32>
    %236 = arith.addf %233, %235 : vector<2x128xf32>
    %237 = math.tanh %236 : vector<2x128xf32>
    %238 = arith.negf %236 : vector<2x128xf32>
    %239 = math.exp %238 : vector<2x128xf32>
    %cst_50 = arith.constant 1.000000e+00 : f32
    %240 = vector.broadcast %cst_50 : f32 to vector<2x128xf32>
    %241 = arith.addf %240, %239 : vector<2x128xf32>
    %242 = arith.divf %240, %241 : vector<2x128xf32>
    %243 = arith.select %19, %237, %242 : vector<2x128xi1>, vector<2x128xf32>
    %244 = vector.extract_strided_slice %243 {offsets = [0, 0], sizes = [2, 32], strides = [1, 1]} : vector<2x128xf32> to vector<2x32xf32>
    %245 = vector.extract_strided_slice %243 {offsets = [0, 32], sizes = [2, 32], strides = [1, 1]} : vector<2x128xf32> to vector<2x32xf32>
    %246 = vector.extract_strided_slice %243 {offsets = [0, 64], sizes = [2, 32], strides = [1, 1]} : vector<2x128xf32> to vector<2x32xf32>
    %247 = vector.extract_strided_slice %243 {offsets = [0, 96], sizes = [2, 32], strides = [1, 1]} : vector<2x128xf32> to vector<2x32xf32>
    %248 = arith.mulf %245, %208 : vector<2x32xf32>
    %249 = arith.mulf %244, %246 : vector<2x32xf32>
    %250 = arith.addf %248, %249 : vector<2x32xf32>
    %251 = math.tanh %250 : vector<2x32xf32>
    %252 = arith.mulf %247, %251 : vector<2x32xf32>
    %253 = tpu.concatenate %252, %230 in 1 : vector<2x32xf32>, vector<2x32xf32> -> vector<2x64xf32>
    %254 = arith.truncf %253 : vector<2x64xf32> to vector<2x64xbf16>
    %cst_51 = arith.constant dense<0.000000e+00> : vector<2x128xf32>
    %255 = tpu.matmul %254, %1, %cst_51 {dimension_numbers = #tpu.dot_dimension_numbers<[1], [0], [0], [1], [0, 0, 1, 1], [], []>} : vector<2x64xbf16>, vector<64x128xbf16>, vector<2x128xf32> -> vector<2x128xf32>
    %256 = arith.addf %255, %13 : vector<2x128xf32>
    %257 = math.tanh %256 : vector<2x128xf32>
    %258 = arith.negf %256 : vector<2x128xf32>
    %259 = math.exp %258 : vector<2x128xf32>
    %cst_52 = arith.constant 1.000000e+00 : f32
    %260 = vector.broadcast %cst_52 : f32 to vector<2x128xf32>
    %261 = arith.addf %260, %259 : vector<2x128xf32>
    %262 = arith.divf %260, %261 : vector<2x128xf32>
    %263 = arith.select %19, %257, %262 : vector<2x128xi1>, vector<2x128xf32>
    %264 = vector.extract_strided_slice %263 {offsets = [0, 0], sizes = [2, 32], strides = [1, 1]} : vector<2x128xf32> to vector<2x32xf32>
    %265 = vector.extract_strided_slice %263 {offsets = [0, 32], sizes = [2, 32], strides = [1, 1]} : vector<2x128xf32> to vector<2x32xf32>
    %266 = vector.extract_strided_slice %263 {offsets = [0, 64], sizes = [2, 32], strides = [1, 1]} : vector<2x128xf32> to vector<2x32xf32>
    %267 = vector.extract_strided_slice %263 {offsets = [0, 96], sizes = [2, 32], strides = [1, 1]} : vector<2x128xf32> to vector<2x32xf32>
    %268 = arith.mulf %265, %228 : vector<2x32xf32>
    %269 = arith.mulf %264, %266 : vector<2x32xf32>
    %270 = arith.addf %268, %269 : vector<2x32xf32>
    %271 = math.tanh %270 : vector<2x32xf32>
    %272 = arith.mulf %267, %271 : vector<2x32xf32>
    %c6_i32 = arith.constant 6 : i32
    %c2_i32_53 = arith.constant 2 : i32
    %273 = arith.muli %c6_i32, %c2_i32_53 : i32
    %274 = arith.index_cast %273 : i32 to index
    %c0_54 = arith.constant 0 : index
    %275 = vector.load %arg10[%274, %c0_54] : memref<16x128xf32, #tpu.memory_space<vmem>>, vector<2x128xf32>
    %276 = arith.truncf %252 : vector<2x32xf32> to vector<2x32xbf16>
    %cst_55 = arith.constant dense<0.000000e+00> : vector<2x128xf32>
    %277 = tpu.matmul %276, %0, %cst_55 {dimension_numbers = #tpu.dot_dimension_numbers<[1], [0], [0], [1], [0, 0, 1, 1], [], []>} : vector<2x32xbf16>, vector<32x128xbf16>, vector<2x128xf32> -> vector<2x128xf32>
    %278 = arith.addf %275, %277 : vector<2x128xf32>
    %279 = math.tanh %278 : vector<2x128xf32>
    %280 = arith.negf %278 : vector<2x128xf32>
    %281 = math.exp %280 : vector<2x128xf32>
    %cst_56 = arith.constant 1.000000e+00 : f32
    %282 = vector.broadcast %cst_56 : f32 to vector<2x128xf32>
    %283 = arith.addf %282, %281 : vector<2x128xf32>
    %284 = arith.divf %282, %283 : vector<2x128xf32>
    %285 = arith.select %19, %279, %284 : vector<2x128xi1>, vector<2x128xf32>
    %286 = vector.extract_strided_slice %285 {offsets = [0, 0], sizes = [2, 32], strides = [1, 1]} : vector<2x128xf32> to vector<2x32xf32>
    %287 = vector.extract_strided_slice %285 {offsets = [0, 32], sizes = [2, 32], strides = [1, 1]} : vector<2x128xf32> to vector<2x32xf32>
    %288 = vector.extract_strided_slice %285 {offsets = [0, 64], sizes = [2, 32], strides = [1, 1]} : vector<2x128xf32> to vector<2x32xf32>
    %289 = vector.extract_strided_slice %285 {offsets = [0, 96], sizes = [2, 32], strides = [1, 1]} : vector<2x128xf32> to vector<2x32xf32>
    %290 = arith.mulf %287, %250 : vector<2x32xf32>
    %291 = arith.mulf %286, %288 : vector<2x32xf32>
    %292 = arith.addf %290, %291 : vector<2x32xf32>
    %293 = math.tanh %292 : vector<2x32xf32>
    %294 = arith.mulf %289, %293 : vector<2x32xf32>
    %295 = tpu.concatenate %294, %272 in 1 : vector<2x32xf32>, vector<2x32xf32> -> vector<2x64xf32>
    %296 = arith.truncf %295 : vector<2x64xf32> to vector<2x64xbf16>
    %cst_57 = arith.constant dense<0.000000e+00> : vector<2x128xf32>
    %297 = tpu.matmul %296, %1, %cst_57 {dimension_numbers = #tpu.dot_dimension_numbers<[1], [0], [0], [1], [0, 0, 1, 1], [], []>} : vector<2x64xbf16>, vector<64x128xbf16>, vector<2x128xf32> -> vector<2x128xf32>
    %298 = arith.addf %297, %13 : vector<2x128xf32>
    %299 = math.tanh %298 : vector<2x128xf32>
    %300 = arith.negf %298 : vector<2x128xf32>
    %301 = math.exp %300 : vector<2x128xf32>
    %cst_58 = arith.constant 1.000000e+00 : f32
    %302 = vector.broadcast %cst_58 : f32 to vector<2x128xf32>
    %303 = arith.addf %302, %301 : vector<2x128xf32>
    %304 = arith.divf %302, %303 : vector<2x128xf32>
    %305 = arith.select %19, %299, %304 : vector<2x128xi1>, vector<2x128xf32>
    %306 = vector.extract_strided_slice %305 {offsets = [0, 0], sizes = [2, 32], strides = [1, 1]} : vector<2x128xf32> to vector<2x32xf32>
    %307 = vector.extract_strided_slice %305 {offsets = [0, 32], sizes = [2, 32], strides = [1, 1]} : vector<2x128xf32> to vector<2x32xf32>
    %308 = vector.extract_strided_slice %305 {offsets = [0, 64], sizes = [2, 32], strides = [1, 1]} : vector<2x128xf32> to vector<2x32xf32>
    %309 = vector.extract_strided_slice %305 {offsets = [0, 96], sizes = [2, 32], strides = [1, 1]} : vector<2x128xf32> to vector<2x32xf32>
    %310 = arith.mulf %307, %270 : vector<2x32xf32>
    %311 = arith.mulf %306, %308 : vector<2x32xf32>
    %312 = arith.addf %310, %311 : vector<2x32xf32>
    %313 = math.tanh %312 : vector<2x32xf32>
    %314 = arith.mulf %309, %313 : vector<2x32xf32>
    %c7_i32 = arith.constant 7 : i32
    %c2_i32_59 = arith.constant 2 : i32
    %315 = arith.muli %c7_i32, %c2_i32_59 : i32
    %316 = arith.index_cast %315 : i32 to index
    %c0_60 = arith.constant 0 : index
    %317 = vector.load %arg10[%316, %c0_60] : memref<16x128xf32, #tpu.memory_space<vmem>>, vector<2x128xf32>
    %318 = arith.truncf %294 : vector<2x32xf32> to vector<2x32xbf16>
    %cst_61 = arith.constant dense<0.000000e+00> : vector<2x128xf32>
    %319 = tpu.matmul %318, %0, %cst_61 {dimension_numbers = #tpu.dot_dimension_numbers<[1], [0], [0], [1], [0, 0, 1, 1], [], []>} : vector<2x32xbf16>, vector<32x128xbf16>, vector<2x128xf32> -> vector<2x128xf32>
    %320 = arith.addf %317, %319 : vector<2x128xf32>
    %321 = math.tanh %320 : vector<2x128xf32>
    %322 = arith.negf %320 : vector<2x128xf32>
    %323 = math.exp %322 : vector<2x128xf32>
    %cst_62 = arith.constant 1.000000e+00 : f32
    %324 = vector.broadcast %cst_62 : f32 to vector<2x128xf32>
    %325 = arith.addf %324, %323 : vector<2x128xf32>
    %326 = arith.divf %324, %325 : vector<2x128xf32>
    %327 = arith.select %19, %321, %326 : vector<2x128xi1>, vector<2x128xf32>
    %328 = vector.extract_strided_slice %327 {offsets = [0, 0], sizes = [2, 32], strides = [1, 1]} : vector<2x128xf32> to vector<2x32xf32>
    %329 = vector.extract_strided_slice %327 {offsets = [0, 32], sizes = [2, 32], strides = [1, 1]} : vector<2x128xf32> to vector<2x32xf32>
    %330 = vector.extract_strided_slice %327 {offsets = [0, 64], sizes = [2, 32], strides = [1, 1]} : vector<2x128xf32> to vector<2x32xf32>
    %331 = vector.extract_strided_slice %327 {offsets = [0, 96], sizes = [2, 32], strides = [1, 1]} : vector<2x128xf32> to vector<2x32xf32>
    %332 = arith.mulf %329, %292 : vector<2x32xf32>
    %333 = arith.mulf %328, %330 : vector<2x32xf32>
    %334 = arith.addf %332, %333 : vector<2x32xf32>
    %335 = math.tanh %334 : vector<2x32xf32>
    %336 = arith.mulf %331, %335 : vector<2x32xf32>
    %337 = tpu.concatenate %336, %314 in 1 : vector<2x32xf32>, vector<2x32xf32> -> vector<2x64xf32>
    %338 = arith.truncf %337 : vector<2x64xf32> to vector<2x64xbf16>
    %cst_63 = arith.constant dense<0.000000e+00> : vector<2x128xf32>
    %339 = tpu.matmul %338, %1, %cst_63 {dimension_numbers = #tpu.dot_dimension_numbers<[1], [0], [0], [1], [0, 0, 1, 1], [], []>} : vector<2x64xbf16>, vector<64x128xbf16>, vector<2x128xf32> -> vector<2x128xf32>
    %340 = arith.addf %339, %13 : vector<2x128xf32>
    %341 = math.tanh %340 : vector<2x128xf32>
    %342 = arith.negf %340 : vector<2x128xf32>
    %343 = math.exp %342 : vector<2x128xf32>
    %cst_64 = arith.constant 1.000000e+00 : f32
    %344 = vector.broadcast %cst_64 : f32 to vector<2x128xf32>
    %345 = arith.addf %344, %343 : vector<2x128xf32>
    %346 = arith.divf %344, %345 : vector<2x128xf32>
    %347 = arith.select %19, %341, %346 : vector<2x128xi1>, vector<2x128xf32>
    %348 = vector.extract_strided_slice %347 {offsets = [0, 0], sizes = [2, 32], strides = [1, 1]} : vector<2x128xf32> to vector<2x32xf32>
    %349 = vector.extract_strided_slice %347 {offsets = [0, 32], sizes = [2, 32], strides = [1, 1]} : vector<2x128xf32> to vector<2x32xf32>
    %350 = vector.extract_strided_slice %347 {offsets = [0, 64], sizes = [2, 32], strides = [1, 1]} : vector<2x128xf32> to vector<2x32xf32>
    %351 = vector.extract_strided_slice %347 {offsets = [0, 96], sizes = [2, 32], strides = [1, 1]} : vector<2x128xf32> to vector<2x32xf32>
    %352 = arith.mulf %349, %312 : vector<2x32xf32>
    %353 = arith.mulf %348, %350 : vector<2x32xf32>
    %354 = arith.addf %352, %353 : vector<2x32xf32>
    %355 = math.tanh %354 : vector<2x32xf32>
    %356 = arith.mulf %351, %355 : vector<2x32xf32>
    %c8_i32 = arith.constant 8 : i32
    %357 = arith.truncf %356 : vector<2x32xf32> to vector<2x32xbf16>
    %cst_65 = arith.constant dense<0.000000e+00> : vector<2x128xf32>
    %358 = tpu.matmul %357, %2, %cst_65 {dimension_numbers = #tpu.dot_dimension_numbers<[1], [0], [0], [1], [0, 0, 1, 1], [], []>} : vector<2x32xbf16>, vector<32x128xbf16>, vector<2x128xf32> -> vector<2x128xf32>
    %c0_66 = arith.constant 0 : index
    %c0_67 = arith.constant 0 : index
    %359 = vector.load %arg8[%c0_66, %c0_67] : memref<1x128xf32, #tpu.memory_space<vmem>>, vector<1x128xf32>
    %360 = vector.broadcast %359 : vector<1x128xf32> to vector<2x128xf32>
    %361 = arith.addf %358, %360 : vector<2x128xf32>
    %cst_68 = arith.constant dense<0xFF800000> : vector<2xf32>
    %362 = vector.multi_reduction <maximumf>, %361, %cst_68 [1] : vector<2x128xf32> to vector<2xf32>
    %363 = vector.shape_cast %362 : vector<2xf32> to vector<2x1xf32>
    %364 = vector.broadcast %363 : vector<2x1xf32> to vector<2x128xf32>
    %365 = arith.subf %361, %364 : vector<2x128xf32>
    %366 = math.exp %365 : vector<2x128xf32>
    %cst_69 = arith.constant dense<0.000000e+00> : vector<2xf32>
    %367 = vector.multi_reduction <add>, %366, %cst_69 [1] : vector<2x128xf32> to vector<2xf32>
    %368 = vector.shape_cast %367 : vector<2xf32> to vector<2x1xf32>
    %369 = tpu.reciprocal %368 {approx = true} : vector<2x1xf32> -> vector<2x1xf32>
    %370 = vector.broadcast %369 : vector<2x1xf32> to vector<2x128xf32>
    %371 = arith.mulf %366, %370 : vector<2x128xf32>
    %c0_70 = arith.constant 0 : index
    %c0_71 = arith.constant 0 : index
    %372 = vector.load %arg9[%c0_70, %c0_71] : memref<2x128xf32, #tpu.memory_space<vmem>>, vector<2x128xf32>
    tpu.vector_store %arg9[%c0_70, %c0_71], %371 {strides = array<i32>} : memref<2x128xf32, #tpu.memory_space<vmem>>, vector<2x128xf32>,
    return
  }
  func.func @transform_0(%arg0: i32) -> (i32, i32, i32) {
    %c0_i32 = arith.constant 0 : i32
    %c0_i32_0 = arith.constant 0 : i32
    %c0_i32_1 = arith.constant 0 : i32
    return %arg0, %c0_i32, %c0_i32_0 : i32, i32, i32
  }
  func.func @transform_1(%arg0: i32) -> (i32, i32) {
    %c0_i32 = arith.constant 0 : i32
    %c0_i32_0 = arith.constant 0 : i32
    %c0_i32_1 = arith.constant 0 : i32
    return %c0_i32, %c0_i32_0 : i32, i32
  }
  func.func @transform_2(%arg0: i32) -> (i32, i32) {
    %c0_i32 = arith.constant 0 : i32
    %c0_i32_0 = arith.constant 0 : i32
    %c0_i32_1 = arith.constant 0 : i32
    return %c0_i32, %c0_i32_0 : i32, i32
  }
  func.func @transform_3(%arg0: i32) -> (i32, i32) {
    %c0_i32 = arith.constant 0 : i32
    %c0_i32_0 = arith.constant 0 : i32
    %c0_i32_1 = arith.constant 0 : i32
    return %c0_i32, %c0_i32_0 : i32, i32
  }
  func.func @transform_4(%arg0: i32) -> (i32, i32) {
    %c0_i32 = arith.constant 0 : i32
    %c0_i32_0 = arith.constant 0 : i32
    %c0_i32_1 = arith.constant 0 : i32
    return %c0_i32, %c0_i32_0 : i32, i32
  }
  func.func @transform_5(%arg0: i32) -> (i32, i32) {
    %c0_i32 = arith.constant 0 : i32
    %c0_i32_0 = arith.constant 0 : i32
    %c0_i32_1 = arith.constant 0 : i32
    return %c0_i32, %c0_i32_0 : i32, i32
  }
  func.func @transform_6(%arg0: i32) -> (i32, i32) {
    %c0_i32 = arith.constant 0 : i32
    %c0_i32_0 = arith.constant 0 : i32
    %c0_i32_1 = arith.constant 0 : i32
    return %c0_i32, %c0_i32_0 : i32, i32
  }
  func.func @transform_7(%arg0: i32) -> (i32, i32) {
    %c0_i32 = arith.constant 0 : i32
    %c0_i32_0 = arith.constant 0 : i32
    %c0_i32_1 = arith.constant 0 : i32
    return %c0_i32, %c0_i32_0 : i32, i32
  }
  func.func @transform_8(%arg0: i32) -> (i32, i32) {
    %c0_i32 = arith.constant 0 : i32
    %c0_i32_0 = arith.constant 0 : i32
    return %arg0, %c0_i32 : i32, i32
  }
}

</mosaic_0001>

<llo_original>
// kernel: deeplog_forward.1
$region0: #{deeplog_forward.1}
  #allocation0 [shape = 'u32[]', space=smem, size = 0x4, offset = 0x4, fixed_abs, tag = 'smem constant byte address 0x4 - core index']
  #allocation1 [shape = 'u32[144,128]{1,0:T(1,128)}', space=vmem, size = 0x12000, scoped, tag = 'internal scratch']
  #allocation2 [shape = 'f32[16,128]{1,0:T(8,128)}', space=vmem, size = 0x2000, scoped, tag = 'scratch operand']
  %s0 = inlined_call_operand.vmem [shape: bf16[1,16,16], index: 0, kind: input, shape index: {}]
  %s1 = inlined_call_operand.hbm [shape: bf16[16,128], index: 1, kind: input, shape index: {}]
  %s2 = inlined_call_operand.hbm [shape: bf16[32,128], index: 2, kind: input, shape index: {}]
  %s3 = inlined_call_operand.vmem [shape: f32[1,128], index: 3, kind: input, shape index: {}]
  %s4 = inlined_call_operand.vmem [shape: bf16[64,128], index: 4, kind: input, shape index: {}]
  %s5 = inlined_call_operand.vmem [shape: f32[1,128], index: 5, kind: input, shape index: {}]
  %s6 = inlined_call_operand.vmem [shape: bf16[32,128], index: 6, kind: input, shape index: {}]
  %s7 = inlined_call_operand.hbm [shape: f32[1,128], index: 7, kind: input, shape index: {}]
  %s8 = inlined_call_operand.hbm [shape: f32[2,128], index: 8, kind: output, shape index: {}]
  %s9 = sld [smem:[#allocation0]]
  $region54: #{deeplog_forward.1} parent=0
    _
  %s11 = ssub.s32 1, %s9
  %s12 = scalar_select 0, %s11, %s9
  $region1: #{deeplog_forward.1} parent=0
    #allocation3 [shape = 'u8[4096]{0}', space=vmem, size = 0x1000, scoped, tag = 'input window, operand 1, single buffered']
    #allocation4 [shape = 's32[1]{0}', space=sflag, size = 0x4, scoped, tag = 'scoped memory for deeplog_forward.1']
    #allocation5 [shape = 's32[1]{0}', space=sflag, size = 0x4, scoped, tag = 'scoped memory for deeplog_forward.1']
    #allocation6 [shape = 'u8[8192]{0}', space=vmem, size = 0x2000, scoped, tag = 'input window, operand 2, single buffered']
    #allocation7 [shape = 's32[1]{0}', space=sflag, size = 0x4, scoped, tag = 'scoped memory for deeplog_forward.1']
    #allocation8 [shape = 'u8[512]{0}', space=vmem, size = 0x400, scoped, tag = 'input window, operand 7, single buffered']
    #allocation9 [shape = 'u8[1024]{0}', space=vmem, size = 0x400, scoped, tag = 'output window, operand 0, single buffered']
    %13 = vsyncpa [#allocation4], 0
    %14 = vsyncpa [#allocation7], 0
    %15 = vsyncpa [#allocation5], 0
    // Predicated region
    $region2: #{deeplog_forward.1} parent=1 // pred_check
      _
    $region3: #{deeplog_forward.1} parent=1 // pred_check_branch
      %17 = sbr.rel (0) target = $region5
    $region4: #{deeplog_forward.1} parent=1 // pred_region
      _
    $region5: #{deeplog_forward.1} parent=1 // pred_fallthru
      _
    // Predicated region
    $region6: #{deeplog_forward.1} parent=1 // pred_check
      _
    $region7: #{deeplog_forward.1} parent=1 // pred_check_branch
      %19 = sbr.rel (0) target = $region9
    $region8: #{deeplog_forward.1} parent=1 // pred_region
      %s21 = ssub.s32 128, 128
      %22 = vsyncadd [#allocation4], %s21
      %s23 = sshll.u32 [#allocation3], 4
      %s24 = int_to_ptr.vmem [resolvable:$true] %s23
      %29 = dma.hbm_to_vmem [thread:$0]  %s1, 128, %s24, [#allocation4], 64, 64, 4
    $region9: #{deeplog_forward.1} parent=1 // pred_fallthru
      _
    // Predicated region
    $region10: #{deeplog_forward.1} parent=1 // pred_check
      _
    $region11: #{deeplog_forward.1} parent=1 // pred_check_branch
      %31 = sbr.rel (0) target = $region13
    $region12: #{deeplog_forward.1} parent=1 // pred_region
      %s33 = ssub.s32 256, 256
      %34 = vsyncadd [#allocation7], %s33
      %s35 = sshll.u32 [#allocation6], 4
      %s36 = int_to_ptr.vmem [resolvable:$true] %s35
      %41 = dma.hbm_to_vmem [thread:$0]  %s2, 256, %s36, [#allocation7], 64, 64, 4
    $region13: #{deeplog_forward.1} parent=1 // pred_fallthru
      _
    // Predicated region
    $region14: #{deeplog_forward.1} parent=1 // pred_check
      _
    $region15: #{deeplog_forward.1} parent=1 // pred_check_branch
      %43 = sbr.rel (0) target = $region17
    $region16: #{deeplog_forward.1} parent=1 // pred_region
      _
    $region17: #{deeplog_forward.1} parent=1 // pred_fallthru
      _
    // Predicated region
    $region18: #{deeplog_forward.1} parent=1 // pred_check
      _
    $region19: #{deeplog_forward.1} parent=1 // pred_check_branch
      %45 = sbr.rel (0) target = $region21
    $region20: #{deeplog_forward.1} parent=1 // pred_region
      _
    $region21: #{deeplog_forward.1} parent=1 // pred_fallthru
      _
    // Predicated region
    $region22: #{deeplog_forward.1} parent=1 // pred_check
      _
    $region23: #{deeplog_forward.1} parent=1 // pred_check_branch
      %47 = sbr.rel (0) target = $region25
    $region24: #{deeplog_forward.1} parent=1 // pred_region
      _
    $region25: #{deeplog_forward.1} parent=1 // pred_fallthru
      _
    // Predicated region
    $region26: #{deeplog_forward.1} parent=1 // pred_check
      _
    $region27: #{deeplog_forward.1} parent=1 // pred_check_branch
      %49 = sbr.rel (0) target = $region29
    $region28: #{deeplog_forward.1} parent=1 // pred_region
      _
    $region29: #{deeplog_forward.1} parent=1 // pred_fallthru
      _
    // Predicated region
    $region30: #{deeplog_forward.1} parent=1 // pred_check
      _
    $region31: #{deeplog_forward.1} parent=1 // pred_check_branch
      %51 = sbr.rel (0) target = $region33
    $region32: #{deeplog_forward.1} parent=1 // pred_region
      %s53 = ssub.s32 16, 16
      %54 = vsyncadd [#allocation7], %s53
      %s56 = sshll.u32 [#allocation8], 4
      %s57 = int_to_ptr.vmem [resolvable:$true] %s56
      %59 = dma.hbm_to_vmem [thread:$0]  %s7, 16, %s57, [#allocation7]
    $region33: #{deeplog_forward.1} parent=1 // pred_fallthru
      _
    // Predicated region
    $region34: #{deeplog_forward.1} parent=1 // pred_check
      _
    $region35: #{deeplog_forward.1} parent=1 // pred_check_branch
      %61 = sbr.rel (0) target = $region37
    $region36: #{deeplog_forward.1} parent=1 // pred_region
      %62 = dma.done [#allocation4], 128
    $region37: #{deeplog_forward.1} parent=1 // pred_fallthru
      _
    // Predicated region
    $region38: #{deeplog_forward.1} parent=1 // pred_check
      _
    $region39: #{deeplog_forward.1} parent=1 // pred_check_branch
      %64 = sbr.rel (0) target = $region41
    $region40: #{deeplog_forward.1} parent=1 // pred_region
      %65 = dma.done [#allocation7], 256
    $region41: #{deeplog_forward.1} parent=1 // pred_fallthru
      _
    // Predicated region
    $region42: #{deeplog_forward.1} parent=1 // pred_check
      _
    $region43: #{deeplog_forward.1} parent=1 // pred_check_branch
      %67 = sbr.rel (0) target = $region45
    $region44: #{deeplog_forward.1} parent=1 // pred_region
      %68 = dma.done [#allocation7], 16
    $region45: #{deeplog_forward.1} parent=1 // pred_fallthru
      _
    %v70 = vld [vmem:[#allocation6] sm:$0xf]
    %v71 = vld [vmem:[#allocation6 + $0x4] sm:$0xf]
    %v72 = vld [vmem:[#allocation6 + $0x8] sm:$0xf]
    %v73 = vld [vmem:[#allocation6 + $0xc] sm:$0xf]
    %v74 = vld [vmem:[%s4] sm:$0xf]
    %v75 = vld [vmem:[%s4 + $0x4] sm:$0xf]
    %v76 = vld [vmem:[%s4 + $0x8] sm:$0xf]
    %v77 = vld [vmem:[%s4 + $0xc] sm:$0xf]
    %v78 = vld [vmem:[%s4 + $0x10] sm:$0xf]
    %v79 = vld [vmem:[%s4 + $0x14] sm:$0xf]
    %v80 = vld [vmem:[%s4 + $0x18] sm:$0xf]
    %v81 = vld [vmem:[%s4 + $0x1c] sm:$0xf]
    %v82 = vld [vmem:[%s6] sm:$0xf]
    %v83 = vld [vmem:[%s6 + $0x4] sm:$0xf]
    %v84 = vld [vmem:[%s6 + $0x8] sm:$0xf]
    %v85 = vld [vmem:[%s6 + $0xc] sm:$0xf]
    %v86 = vld [vmem:[%s0] sm:$0xf]
    %v87 = vld [vmem:[%s0 + $0x4] sm:$0xf]
    %v88 = vld [vmem:[#allocation3] sm:$0xf]
    %v89 = vld [vmem:[#allocation3 + $0x4] sm:$0xf]
    %v90 = vld [vmem:[%s3] sm:$0x1]
    %v92 = vlaneseq
    %v93 = vshrl.u32 %v92, 7
    %v94 = vsub.s32 0, %v93
    %v95 = vrot.slane %v90, %v94
    %v99 = vunpack.c.l.b16 %v86
    %v100 = vunpack.c.l.b16 %v87
    %v101 = vpack.c.b16 %v100, %v99
    %v104 = vunpack.c.l.b16 %v88
    %v105 = vunpack.c.l.b16 %v89
    %v106 = vpack.c.b16 %v105, %v104
    %vm108 = vcmask 130048
    %v110 = vsel %vm108, %v101, 0
    %112 = vmatprep.subr.bf16.mxu0 0
    %113 = vmatpush1.bf16.msra.mxu0 %v106
    %114 = vmatprep.subr.bf16.mxu0 0
    %115 = vmatpush1.bf16.msra.mxu0 0
    %116 = vmatprep.subr.bf16.mxu0 0
    %117 = vmatpush1.bf16.msra.mxu0 0
    %118 = vmatprep.subr.bf16.mxu0 0
    %119 = vmatpush1.bf16.msra.mxu0 0
    %120 = vmatprep.subr.bf16.mxu0 0
    %121 = vmatpush1.bf16.msra.mxu0 0
    %122 = vmatprep.subr.bf16.mxu0 0
    %123 = vmatpush1.bf16.msra.mxu0 0
    %124 = vmatprep.subr.bf16.mxu0 0
    %125 = vmatpush1.bf16.msra.mxu0 0
    %126 = vmatprep.subr.bf16.mxu0 0
    %127 = vmatpush1.bf16.msra.mxu0 0
    %128 = vmatprep.subr.bf16.mxu0 0
    %129 = vmatpush1.bf16.msra.mxu0 0
    %130 = vmatprep.subr.bf16.mxu0 0
    %131 = vmatpush1.bf16.msra.mxu0 0
    %132 = vmatprep.subr.bf16.mxu0 0
    %133 = vmatpush1.bf16.msra.mxu0 0
    %134 = vmatprep.subr.bf16.mxu0 0
    %135 = vmatpush1.bf16.msra.mxu0 0
    %136 = vmatprep.subr.bf16.mxu0 0
    %137 = vmatpush1.bf16.msra.mxu0 0
    %138 = vmatprep.subr.bf16.mxu0 0
    %139 = vmatpush1.bf16.msra.mxu0 0
    %140 = vmatprep.subr.bf16.mxu0 0
    %141 = vmatpush1.bf16.msra.mxu0 0
    %142 = vmatprep.subr.bf16.mxu0 0
    %143 = vmatpush1.bf16.msra.mxu0 0
    %144 = vmatprep.mubr.bf16.mxu0 0
    %145 = vmatmul.mubr.bf16.gmra.mrb[0].mxu0 %v110
    %v146 = vpop.f32.mrb[0].mxu0
    %v147 = vadd.f32 %v95, %v146
    %v148 = vpop.f32.mrb[0].mxu0
    %v149 = vpop.f32.mrb[0].mxu0
    %v150 = vadd.f32 %v95, %v149
    %v151 = vpop.f32.mrb[0].mxu0
    %152 = vdwg.mxu0
    %153 = vst [vmem:[#allocation2] sm:$0xff] %v147
    %154 = vst [vmem:[#allocation2 + $0x8] sm:$0xff] %v150
    %v155 = vld [vmem:[%s5] sm:$0x1]
    %v157 = vlaneseq
    %v158 = vshrl.u32 %v157, 7
    %v159 = vsub.s32 0, %v158
    %v160 = vrot.slane %v155, %v159
    %v162 = vlaneseq
    %v163 = vand.u32 %v162, 127
    %vm164 = vcmp.ge.s32.totalorder %v163, 64
    %vm165 = vcmp.lt.s32.totalorder %v163, 96
    %vm166 = vmand %vm164, %vm165
    %v167 = vld [vmem:[#allocation2] sm:$0x3]
    %v172 = vunpack.c.l.b16 %v70
    %v173 = vunpack.c.l.b16 %v71
    %v174 = vunpack.c.l.b16 %v72
    %v175 = vunpack.c.l.b16 %v73
    %v176 = vpack.c.b16 %v173, %v172
    %v177 = vpack.c.b16 %v175, %v174
    %vm180 = vcmask 261120
    %v182 = vsel %vm180, 0, 0
    %184 = vmatprep.subr.bf16.mxu0 0
    %185 = vmatpush1.bf16.msra.mxu0 %v176
    %186 = vmatprep.subr.bf16.mxu0 0
    %187 = vmatpush1.bf16.msra.mxu0 %v177
    %188 = vmatprep.subr.bf16.mxu0 0
    %189 = vmatpush1.bf16.msra.mxu0 0
    %190 = vmatprep.subr.bf16.mxu0 0
    %191 = vmatpush1.bf16.msra.mxu0 0
    %192 = vmatprep.subr.bf16.mxu0 0
    %193 = vmatpush1.bf16.msra.mxu0 0
    %194 = vmatprep.subr.bf16.mxu0 0
    %195 = vmatpush1.bf16.msra.mxu0 0
    %196 = vmatprep.subr.bf16.mxu0 0
    %197 = vmatpush1.bf16.msra.mxu0 0
    %198 = vmatprep.subr.bf16.mxu0 0
    %199 = vmatpush1.bf16.msra.mxu0 0
    %200 = vmatprep.subr.bf16.mxu0 0
    %201 = vmatpush1.bf16.msra.mxu0 0
    %202 = vmatprep.subr.bf16.mxu0 0
    %203 = vmatpush1.bf16.msra.mxu0 0
    %204 = vmatprep.subr.bf16.mxu0 0
    %205 = vmatpush1.bf16.msra.mxu0 0
    %206 = vmatprep.subr.bf16.mxu0 0
    %207 = vmatpush1.bf16.msra.mxu0 0
    %208 = vmatprep.subr.bf16.mxu0 0
    %209 = vmatpush1.bf16.msra.mxu0 0
    %210 = vmatprep.subr.bf16.mxu0 0
    %211 = vmatpush1.bf16.msra.mxu0 0
    %212 = vmatprep.subr.bf16.mxu0 0
    %213 = vmatpush1.bf16.msra.mxu0 0
    %214 = vmatprep.subr.bf16.mxu0 0
    %215 = vmatpush1.bf16.msra.mxu0 0
    %216 = vmatprep.mubr.bf16.mxu0 0
    %217 = vmatmul.mubr.bf16.gmra.mrb[0].mxu0 %v182
    %v218 = vpop.f32.mrb[0].mxu0
    %v219 = vadd.f32 0.0, %v218
    %v220 = vpop.f32.mrb[0].mxu0
    %v221 = vpop.f32.mrb[0].mxu0
    %v222 = vpop.f32.mrb[0].mxu0
    %223 = vdwg.mxu0
    %v224 = vadd.f32 %v167, %v219
    %v225 = vtanh.pop %v224
    %v226 = vxor.u32 %v224, 2147483648
    %v227 = vmul.f32 %v226, 1.442695
    %v228 = vpow.pop %v227
    %v229 = vadd.f32 %v228, 1.0
    %v230 = vrcp.pop %v229
    %v231 = vmul.f32 1.0, %v230
    %v232 = vsel %vm166, %v225, %v231
    %v233 = vmul.f32 %v232, 0.0
    %235 = vrot.lane.b32.xlu0 %v232, 64
    %v236 = vpop.permute.xlu0 %235
    %v238 = vmul.f32 %v232, %v236
    %240 = vrot.lane.b32.xlu0 %v238, 32
    %v241 = vpop.permute.xlu0 %240
    %v243 = vadd.f32 %v233, %v241
    %v244 = vtanh.pop %v243
    %246 = vrot.lane.b32.xlu0 %v244, 64
    %v247 = vpop.permute.xlu0 %246
    %v249 = vmul.f32 %v232, %v247
    %251 = vrot.lane.b32.xlu0 %v249, 32
    %v252 = vpop.permute.xlu0 %251
    %v254 = vsel %vm180, %v252, 0.0
    %v255 = vpack.c.bf16 %v254, %v254
    %v264 = vunpack.c.l.b16 %v74
    %v265 = vunpack.c.l.b16 %v75
    %v266 = vunpack.c.l.b16 %v76
    %v267 = vunpack.c.l.b16 %v77
    %v268 = vunpack.c.l.b16 %v78
    %v269 = vunpack.c.l.b16 %v79
    %v270 = vunpack.c.l.b16 %v80
    %v271 = vunpack.c.l.b16 %v81
    %v272 = vpack.c.b16 %v265, %v264
    %v273 = vpack.c.b16 %v267, %v266
    %v274 = vpack.c.b16 %v269, %v268
    %v275 = vpack.c.b16 %v271, %v270
    %vm280 = vcmask 523264
    %v282 = vsel %vm280, %v255, 0
    %284 = vmatprep.subr.bf16.mxu0 0
    %285 = vmatpush1.bf16.msra.mxu0 %v272
    %286 = vmatprep.subr.bf16.mxu0 0
    %287 = vmatpush1.bf16.msra.mxu0 %v273
    %288 = vmatprep.subr.bf16.mxu0 0
    %289 = vmatpush1.bf16.msra.mxu0 %v274
    %290 = vmatprep.subr.bf16.mxu0 0
    %291 = vmatpush1.bf16.msra.mxu0 %v275
    %292 = vmatprep.subr.bf16.mxu0 0
    %293 = vmatpush1.bf16.msra.mxu0 0
    %294 = vmatprep.subr.bf16.mxu0 0
    %295 = vmatpush1.bf16.msra.mxu0 0
    %296 = vmatprep.subr.bf16.mxu0 0
    %297 = vmatpush1.bf16.msra.mxu0 0
    %298 = vmatprep.subr.bf16.mxu0 0
    %299 = vmatpush1.bf16.msra.mxu0 0
    %300 = vmatprep.subr.bf16.mxu0 0
    %301 = vmatpush1.bf16.msra.mxu0 0
    %302 = vmatprep.subr.bf16.mxu0 0
    %303 = vmatpush1.bf16.msra.mxu0 0
    %304 = vmatprep.subr.bf16.mxu0 0
    %305 = vmatpush1.bf16.msra.mxu0 0
    %306 = vmatprep.subr.bf16.mxu0 0
    %307 = vmatpush1.bf16.msra.mxu0 0
    %308 = vmatprep.subr.bf16.mxu0 0
    %309 = vmatpush1.bf16.msra.mxu0 0
    %310 = vmatprep.subr.bf16.mxu0 0
    %311 = vmatpush1.bf16.msra.mxu0 0
    %312 = vmatprep.subr.bf16.mxu0 0
    %313 = vmatpush1.bf16.msra.mxu0 0
    %314 = vmatprep.subr.bf16.mxu0 0
    %315 = vmatpush1.bf16.msra.mxu0 0
    %316 = vmatprep.mubr.bf16.mxu0 0
    %317 = vmatmul.mubr.bf16.gmra.mrb[0].mxu0 %v282
    %v318 = vpop.f32.mrb[0].mxu0
    %v319 = vadd.f32 %v160, %v318
    %v320 = vpop.f32.mrb[0].mxu0
    %v321 = vpop.f32.mrb[0].mxu0
    %v322 = vpop.f32.mrb[0].mxu0
    %323 = vdwg.mxu0
    %v324 = vtanh.pop %v319
    %v325 = vxor.u32 %v319, 2147483648
    %v326 = vmul.f32 %v325, 1.442695
    %v327 = vpow.pop %v326
    %v328 = vadd.f32 %v327, 1.0
    %v329 = vrcp.pop %v328
    %v330 = vmul.f32 1.0, %v329
    %v331 = vsel %vm166, %v324, %v330
    %v332 = vmul.f32 %v331, 0.0
    %334 = vrot.lane.b32.xlu0 %v331, 64
    %v335 = vpop.permute.xlu0 %334
    %v337 = vmul.f32 %v331, %v335
    %339 = vrot.lane.b32.xlu0 %v337, 32
    %v340 = vpop.permute.xlu0 %339
    %v342 = vadd.f32 %v332, %v340
    %v343 = vtanh.pop %v342
    %345 = vrot.lane.b32.xlu0 %v343, 64
    %v346 = vpop.permute.xlu0 %345
    %v348 = vmul.f32 %v331, %v346
    %v349 = vld [vmem:[#allocation2 + $0x2] sm:$0x3]
    %v350 = vpack.c.bf16 %v249, %v249
    %352 = vrot.lane.b32.xlu0 %v350, 32
    %v353 = vpop.permute.xlu0 %352
    %v355 = vsel %vm180, %v353, 0
    %357 = vmatprep.subr.bf16.mxu0 0
    %358 = vmatpush1.bf16.msra.mxu0 %v176
    %359 = vmatprep.subr.bf16.mxu0 0
    %360 = vmatpush1.bf16.msra.mxu0 %v177
    %361 = vmatprep.subr.bf16.mxu0 0
    %362 = vmatpush1.bf16.msra.mxu0 0
    %363 = vmatprep.subr.bf16.mxu0 0
    %364 = vmatpush1.bf16.msra.mxu0 0
    %365 = vmatprep.subr.bf16.mxu0 0
    %366 = vmatpush1.bf16.msra.mxu0 0
    %367 = vmatprep.subr.bf16.mxu0 0
    %368 = vmatpush1.bf16.msra.mxu0 0
    %369 = vmatprep.subr.bf16.mxu0 0
    %370 = vmatpush1.bf16.msra.mxu0 0
    %371 = vmatprep.subr.bf16.mxu0 0
    %372 = vmatpush1.bf16.msra.mxu0 0
    %373 = vmatprep.subr.bf16.mxu0 0
    %374 = vmatpush1.bf16.msra.mxu0 0
    %375 = vmatprep.subr.bf16.mxu0 0
    %376 = vmatpush1.bf16.msra.mxu0 0
    %377 = vmatprep.subr.bf16.mxu0 0
    %378 = vmatpush1.bf16.msra.mxu0 0
    %379 = vmatprep.subr.bf16.mxu0 0
    %380 = vmatpush1.bf16.msra.mxu0 0
    %381 = vmatprep.subr.bf16.mxu0 0
    %382 = vmatpush1.bf16.msra.mxu0 0
    %383 = vmatprep.subr.bf16.mxu0 0
    %384 = vmatpush1.bf16.msra.mxu0 0
    %385 = vmatprep.subr.bf16.mxu0 0
    %386 = vmatpush1.bf16.msra.mxu0 0
    %387 = vmatprep.subr.bf16.mxu0 0
    %388 = vmatpush1.bf16.msra.mxu0 0
    %389 = vmatprep.mubr.bf16.mxu0 0
    %390 = vmatmul.mubr.bf16.gmra.mrb[0].mxu0 %v355
    %v391 = vpop.f32.mrb[0].mxu0
    %v392 = vadd.f32 0.0, %v391
    %v393 = vpop.f32.mrb[0].mxu0
    %v394 = vpop.f32.mrb[0].mxu0
    %v395 = vpop.f32.mrb[0].mxu0
    %396 = vdwg.mxu0
    %v397 = vadd.f32 %v349, %v392
    %v398 = vtanh.pop %v397
    %v399 = vxor.u32 %v397, 2147483648
    %v400 = vmul.f32 %v399, 1.442695
    %v401 = vpow.pop %v400
    %v402 = vadd.f32 %v401, 1.0
    %v403 = vrcp.pop %v402
    %v404 = vmul.f32 1.0, %v403
    %v405 = vsel %vm166, %v398, %v404
    %v406 = vmul.f32 %v405, %v243
    %408 = vrot.lane.b32.xlu0 %v405, 64
    %v409 = vpop.permute.xlu0 %408
    %v411 = vmul.f32 %v405, %v409
    %413 = vrot.lane.b32.xlu0 %v411, 32
    %v414 = vpop.permute.xlu0 %413
    %v416 = vadd.f32 %v406, %v414
    %v417 = vtanh.pop %v416
    %419 = vrot.lane.b32.xlu0 %v417, 64
    %v420 = vpop.permute.xlu0 %419
    %v422 = vmul.f32 %v405, %v420
    %424 = vrot.lane.b32.xlu0 %v422, 32
    %v425 = vpop.permute.xlu0 %424
    %428 = vrot.lane.b32.xlu0 %v348, 64
    %v429 = vpop.permute.xlu0 %428
    %v431 = vsel %vm180, %v425, %v429
    %v432 = vpack.c.bf16 %v431, %v431
    %v434 = vsel %vm280, %v432, 0
    %436 = vmatprep.subr.bf16.mxu0 0
    %437 = vmatpush1.bf16.msra.mxu0 %v272
    %438 = vmatprep.subr.bf16.mxu0 0
    %439 = vmatpush1.bf16.msra.mxu0 %v273
    %440 = vmatprep.subr.bf16.mxu0 0
    %441 = vmatpush1.bf16.msra.mxu0 %v274
    %442 = vmatprep.subr.bf16.mxu0 0
    %443 = vmatpush1.bf16.msra.mxu0 %v275
    %444 = vmatprep.subr.bf16.mxu0 0
    %445 = vmatpush1.bf16.msra.mxu0 0
    %446 = vmatprep.subr.bf16.mxu0 0
    %447 = vmatpush1.bf16.msra.mxu0 0
    %448 = vmatprep.subr.bf16.mxu0 0
    %449 = vmatpush1.bf16.msra.mxu0 0
    %450 = vmatprep.subr.bf16.mxu0 0
    %451 = vmatpush1.bf16.msra.mxu0 0
    %452 = vmatprep.subr.bf16.mxu0 0
    %453 = vmatpush1.bf16.msra.mxu0 0
    %454 = vmatprep.subr.bf16.mxu0 0
    %455 = vmatpush1.bf16.msra.mxu0 0
    %456 = vmatprep.subr.bf16.mxu0 0
    %457 = vmatpush1.bf16.msra.mxu0 0
    %458 = vmatprep.subr.bf16.mxu0 0
    %459 = vmatpush1.bf16.msra.mxu0 0
    %460 = vmatprep.subr.bf16.mxu0 0
    %461 = vmatpush1.bf16.msra.mxu0 0
    %462 = vmatprep.subr.bf16.mxu0 0
    %463 = vmatpush1.bf16.msra.mxu0 0
    %464 = vmatprep.subr.bf16.mxu0 0
    %465 = vmatpush1.bf16.msra.mxu0 0
    %466 = vmatprep.subr.bf16.mxu0 0
    %467 = vmatpush1.bf16.msra.mxu0 0
    %468 = vmatprep.mubr.bf16.mxu0 0
    %469 = vmatmul.mubr.bf16.gmra.mrb[0].mxu0 %v434
    %v470 = vpop.f32.mrb[0].mxu0
    %v471 = vadd.f32 %v160, %v470
    %v472 = vpop.f32.mrb[0].mxu0
    %v473 = vpop.f32.mrb[0].mxu0
    %v474 = vpop.f32.mrb[0].mxu0
    %475 = vdwg.mxu0
    %v476 = vtanh.pop %v471
    %v477 = vxor.u32 %v471, 2147483648
    %v478 = vmul.f32 %v477, 1.442695
    %v479 = vpow.pop %v478
    %v480 = vadd.f32 %v479, 1.0
    %v481 = vrcp.pop %v480
    %v482 = vmul.f32 1.0, %v481
    %v483 = vsel %vm166, %v476, %v482
    %v484 = vmul.f32 %v483, %v342
    %486 = vrot.lane.b32.xlu0 %v483, 64
    %v487 = vpop.permute.xlu0 %486
    %v489 = vmul.f32 %v483, %v487
    %491 = vrot.lane.b32.xlu0 %v489, 32
    %v492 = vpop.permute.xlu0 %491
    %v494 = vadd.f32 %v484, %v492
    %v495 = vtanh.pop %v494
    %497 = vrot.lane.b32.xlu0 %v495, 64
    %v498 = vpop.permute.xlu0 %497
    %v500 = vmul.f32 %v483, %v498
    %v501 = vld [vmem:[#allocation2 + $0x4] sm:$0x3]
    %v502 = vpack.c.bf16 %v422, %v422
    %504 = vrot.lane.b32.xlu0 %v502, 32
    %v505 = vpop.permute.xlu0 %504
    %v507 = vsel %vm180, %v505, 0
    %509 = vmatprep.subr.bf16.mxu0 0
    %510 = vmatpush1.bf16.msra.mxu0 %v176
    %511 = vmatprep.subr.bf16.mxu0 0
    %512 = vmatpush1.bf16.msra.mxu0 %v177
    %513 = vmatprep.subr.bf16.mxu0 0
    %514 = vmatpush1.bf16.msra.mxu0 0
    %515 = vmatprep.subr.bf16.mxu0 0
    %516 = vmatpush1.bf16.msra.mxu0 0
    %517 = vmatprep.subr.bf16.mxu0 0
    %518 = vmatpush1.bf16.msra.mxu0 0
    %519 = vmatprep.subr.bf16.mxu0 0
    %520 = vmatpush1.bf16.msra.mxu0 0
    %521 = vmatprep.subr.bf16.mxu0 0
    %522 = vmatpush1.bf16.msra.mxu0 0
    %523 = vmatprep.subr.bf16.mxu0 0
    %524 = vmatpush1.bf16.msra.mxu0 0
    %525 = vmatprep.subr.bf16.mxu0 0
    %526 = vmatpush1.bf16.msra.mxu0 0
    %527 = vmatprep.subr.bf16.mxu0 0
    %528 = vmatpush1.bf16.msra.mxu0 0
    %529 = vmatprep.subr.bf16.mxu0 0
    %530 = vmatpush1.bf16.msra.mxu0 0
    %531 = vmatprep.subr.bf16.mxu0 0
    %532 = vmatpush1.bf16.msra.mxu0 0
    %533 = vmatprep.subr.bf16.mxu0 0
    %534 = vmatpush1.bf16.msra.mxu0 0
    %535 = vmatprep.subr.bf16.mxu0 0
    %536 = vmatpush1.bf16.msra.mxu0 0
    %537 = vmatprep.subr.bf16.mxu0 0
    %538 = vmatpush1.bf16.msra.mxu0 0
    %539 = vmatprep.subr.bf16.mxu0 0
    %540 = vmatpush1.bf16.msra.mxu0 0
    %541 = vmatprep.mubr.bf16.mxu0 0
    %542 = vmatmul.mubr.bf16.gmra.mrb[0].mxu0 %v507
    %v543 = vpop.f32.mrb[0].mxu0
    %v544 = vadd.f32 0.0, %v543
    %v545 = vpop.f32.mrb[0].mxu0
    %v546 = vpop.f32.mrb[0].mxu0
    %v547 = vpop.f32.mrb[0].mxu0
    %548 = vdwg.mxu0
    %v549 = vadd.f32 %v501, %v544
    %v550 = vtanh.pop %v549
    %v551 = vxor.u32 %v549, 2147483648
    %v552 = vmul.f32 %v551, 1.442695
    %v553 = vpow.pop %v552
    %v554 = vadd.f32 %v553, 1.0
    %v555 = vrcp.pop %v554
    %v556 = vmul.f32 1.0, %v555
    %v557 = vsel %vm166, %v550, %v556
    %v558 = vmul.f32 %v557, %v416
    %560 = vrot.lane.b32.xlu0 %v557, 64
    %v561 = vpop.permute.xlu0 %560
    %v563 = vmul.f32 %v557, %v561
    %565 = vrot.lane.b32.xlu0 %v563, 32
    %v566 = vpop.permute.xlu0 %565
    %v568 = vadd.f32 %v558, %v566
    %v569 = vtanh.pop %v568
    %571 = vrot.lane.b32.xlu0 %v569, 64
    %v572 = vpop.permute.xlu0 %571
    %v574 = vmul.f32 %v557, %v572
    %576 = vrot.lane.b32.xlu0 %v574, 32
    %v577 = vpop.permute.xlu0 %576
    %580 = vrot.lane.b32.xlu0 %v500, 64
    %v581 = vpop.permute.xlu0 %580
    %v583 = vsel %vm180, %v577, %v581
    %v584 = vpack.c.bf16 %v583, %v583
    %v586 = vsel %vm280, %v584, 0
    %588 = vmatprep.subr.bf16.mxu0 0
    %589 = vmatpush1.bf16.msra.mxu0 %v272
    %590 = vmatprep.subr.bf16.mxu0 0
    %591 = vmatpush1.bf16.msra.mxu0 %v273
    %592 = vmatprep.subr.bf16.mxu0 0
    %593 = vmatpush1.bf16.msra.mxu0 %v274
    %594 = vmatprep.subr.bf16.mxu0 0
    %595 = vmatpush1.bf16.msra.mxu0 %v275
    %596 = vmatprep.subr.bf16.mxu0 0
    %597 = vmatpush1.bf16.msra.mxu0 0
    %598 = vmatprep.subr.bf16.mxu0 0
    %599 = vmatpush1.bf16.msra.mxu0 0
    %600 = vmatprep.subr.bf16.mxu0 0
    %601 = vmatpush1.bf16.msra.mxu0 0
    %602 = vmatprep.subr.bf16.mxu0 0
    %603 = vmatpush1.bf16.msra.mxu0 0
    %604 = vmatprep.subr.bf16.mxu0 0
    %605 = vmatpush1.bf16.msra.mxu0 0
    %606 = vmatprep.subr.bf16.mxu0 0
    %607 = vmatpush1.bf16.msra.mxu0 0
    %608 = vmatprep.subr.bf16.mxu0 0
    %609 = vmatpush1.bf16.msra.mxu0 0
    %610 = vmatprep.subr.bf16.mxu0 0
    %611 = vmatpush1.bf16.msra.mxu0 0
    %612 = vmatprep.subr.bf16.mxu0 0
    %613 = vmatpush1.bf16.msra.mxu0 0
    %614 = vmatprep.subr.bf16.mxu0 0
    %615 = vmatpush1.bf16.msra.mxu0 0
    %616 = vmatprep.subr.bf16.mxu0 0
    %617 = vmatpush1.bf16.msra.mxu0 0
    %618 = vmatprep.subr.bf16.mxu0 0
    %619 = vmatpush1.bf16.msra.mxu0 0
    %620 = vmatprep.mubr.bf16.mxu0 0
    %621 = vmatmul.mubr.bf16.gmra.mrb[0].mxu0 %v586
    %v622 = vpop.f32.mrb[0].mxu0
    %v623 = vadd.f32 %v160, %v622
    %v624 = vpop.f32.mrb[0].mxu0
    %v625 = vpop.f32.mrb[0].mxu0
    %v626 = vpop.f32.mrb[0].mxu0
    %627 = vdwg.mxu0
    %v628 = vtanh.pop %v623
    %v629 = vxor.u32 %v623, 2147483648
    %v630 = vmul.f32 %v629, 1.442695
    %v631 = vpow.pop %v630
    %v632 = vadd.f32 %v631, 1.0
    %v633 = vrcp.pop %v632
    %v634 = vmul.f32 1.0, %v633
    %v635 = vsel %vm166, %v628, %v634
    %v636 = vmul.f32 %v635, %v494
    %638 = vrot.lane.b32.xlu0 %v635, 64
    %v639 = vpop.permute.xlu0 %638
    %v641 = vmul.f32 %v635, %v639
    %643 = vrot.lane.b32.xlu0 %v641, 32
    %v644 = vpop.permute.xlu0 %643
    %v646 = vadd.f32 %v636, %v644
    %v647 = vtanh.pop %v646
    %649 = vrot.lane.b32.xlu0 %v647, 64
    %v650 = vpop.permute.xlu0 %649
    %v652 = vmul.f32 %v635, %v650
    %v653 = vld [vmem:[#allocation2 + $0x6] sm:$0x3]
    %v654 = vpack.c.bf16 %v574, %v574
    %656 = vrot.lane.b32.xlu0 %v654, 32
    %v657 = vpop.permute.xlu0 %656
    %v659 = vsel %vm180, %v657, 0
    %661 = vmatprep.subr.bf16.mxu0 0
    %662 = vmatpush1.bf16.msra.mxu0 %v176
    %663 = vmatprep.subr.bf16.mxu0 0
    %664 = vmatpush1.bf16.msra.mxu0 %v177
    %665 = vmatprep.subr.bf16.mxu0 0
    %666 = vmatpush1.bf16.msra.mxu0 0
    %667 = vmatprep.subr.bf16.mxu0 0
    %668 = vmatpush1.bf16.msra.mxu0 0
    %669 = vmatprep.subr.bf16.mxu0 0
    %670 = vmatpush1.bf16.msra.mxu0 0
    %671 = vmatprep.subr.bf16.mxu0 0
    %672 = vmatpush1.bf16.msra.mxu0 0
    %673 = vmatprep.subr.bf16.mxu0 0
    %674 = vmatpush1.bf16.msra.mxu0 0
    %675 = vmatprep.subr.bf16.mxu0 0
    %676 = vmatpush1.bf16.msra.mxu0 0
    %677 = vmatprep.subr.bf16.mxu0 0
    %678 = vmatpush1.bf16.msra.mxu0 0
    %679 = vmatprep.subr.bf16.mxu0 0
    %680 = vmatpush1.bf16.msra.mxu0 0
    %681 = vmatprep.subr.bf16.mxu0 0
    %682 = vmatpush1.bf16.msra.mxu0 0
    %683 = vmatprep.subr.bf16.mxu0 0
    %684 = vmatpush1.bf16.msra.mxu0 0
    %685 = vmatprep.subr.bf16.mxu0 0
    %686 = vmatpush1.bf16.msra.mxu0 0
    %687 = vmatprep.subr.bf16.mxu0 0
    %688 = vmatpush1.bf16.msra.mxu0 0
    %689 = vmatprep.subr.bf16.mxu0 0
    %690 = vmatpush1.bf16.msra.mxu0 0
    %691 = vmatprep.subr.bf16.mxu0 0
    %692 = vmatpush1.bf16.msra.mxu0 0
    %693 = vmatprep.mubr.bf16.mxu0 0
    %694 = vmatmul.mubr.bf16.gmra.mrb[0].mxu0 %v659
    %v695 = vpop.f32.mrb[0].mxu0
    %v696 = vadd.f32 0.0, %v695
    %v697 = vpop.f32.mrb[0].mxu0
    %v698 = vpop.f32.mrb[0].mxu0
    %v699 = vpop.f32.mrb[0].mxu0
    %700 = vdwg.mxu0
    %v701 = vadd.f32 %v653, %v696
    %v702 = vtanh.pop %v701
    %v703 = vxor.u32 %v701, 2147483648
    %v704 = vmul.f32 %v703, 1.442695
    %v705 = vpow.pop %v704
    %v706 = vadd.f32 %v705, 1.0
    %v707 = vrcp.pop %v706
    %v708 = vmul.f32 1.0, %v707
    %v709 = vsel %vm166, %v702, %v708
    %v710 = vmul.f32 %v709, %v568
    %712 = vrot.lane.b32.xlu0 %v709, 64
    %v713 = vpop.permute.xlu0 %712
    %v715 = vmul.f32 %v709, %v713
    %717 = vrot.lane.b32.xlu0 %v715, 32
    %v718 = vpop.permute.xlu0 %717
    %v720 = vadd.f32 %v710, %v718
    %v721 = vtanh.pop %v720
    %723 = vrot.lane.b32.xlu0 %v721, 64
    %v724 = vpop.permute.xlu0 %723
    %v726 = vmul.f32 %v709, %v724
    %728 = vrot.lane.b32.xlu0 %v726, 32
    %v729 = vpop.permute.xlu0 %728
    %732 = vrot.lane.b32.xlu0 %v652, 64
    %v733 = vpop.permute.xlu0 %732
    %v735 = vsel %vm180, %v729, %v733
    %v736 = vpack.c.bf16 %v735, %v735
    %v738 = vsel %vm280, %v736, 0
    %740 = vmatprep.subr.bf16.mxu0 0
    %741 = vmatpush1.bf16.msra.mxu0 %v272
    %742 = vmatprep.subr.bf16.mxu0 0
    %743 = vmatpush1.bf16.msra.mxu0 %v273
    %744 = vmatprep.subr.bf16.mxu0 0
    %745 = vmatpush1.bf16.msra.mxu0 %v274
    %746 = vmatprep.subr.bf16.mxu0 0
    %747 = vmatpush1.bf16.msra.mxu0 %v275
    %748 = vmatprep.subr.bf16.mxu0 0
    %749 = vmatpush1.bf16.msra.mxu0 0
    %750 = vmatprep.subr.bf16.mxu0 0
    %751 = vmatpush1.bf16.msra.mxu0 0
    %752 = vmatprep.subr.bf16.mxu0 0
    %753 = vmatpush1.bf16.msra.mxu0 0
    %754 = vmatprep.subr.bf16.mxu0 0
    %755 = vmatpush1.bf16.msra.mxu0 0
    %756 = vmatprep.subr.bf16.mxu0 0
    %757 = vmatpush1.bf16.msra.mxu0 0
    %758 = vmatprep.subr.bf16.mxu0 0
    %759 = vmatpush1.bf16.msra.mxu0 0
    %760 = vmatprep.subr.bf16.mxu0 0
    %761 = vmatpush1.bf16.msra.mxu0 0
    %762 = vmatprep.subr.bf16.mxu0 0
    %763 = vmatpush1.bf16.msra.mxu0 0
    %764 = vmatprep.subr.bf16.mxu0 0
    %765 = vmatpush1.bf16.msra.mxu0 0
    %766 = vmatprep.subr.bf16.mxu0 0
    %767 = vmatpush1.bf16.msra.mxu0 0
    %768 = vmatprep.subr.bf16.mxu0 0
    %769 = vmatpush1.bf16.msra.mxu0 0
    %770 = vmatprep.subr.bf16.mxu0 0
    %771 = vmatpush1.bf16.msra.mxu0 0
    %772 = vmatprep.mubr.bf16.mxu0 0
    %773 = vmatmul.mubr.bf16.gmra.mrb[0].mxu0 %v738
    %v774 = vpop.f32.mrb[0].mxu0
    %v775 = vadd.f32 %v160, %v774
    %v776 = vpop.f32.mrb[0].mxu0
    %v777 = vpop.f32.mrb[0].mxu0
    %v778 = vpop.f32.mrb[0].mxu0
    %779 = vdwg.mxu0
    %v780 = vtanh.pop %v775
    %v781 = vxor.u32 %v775, 2147483648
    %v782 = vmul.f32 %v781, 1.442695
    %v783 = vpow.pop %v782
    %v784 = vadd.f32 %v783, 1.0
    %v785 = vrcp.pop %v784
    %v786 = vmul.f32 1.0, %v785
    %v787 = vsel %vm166, %v780, %v786
    %v788 = vmul.f32 %v787, %v646
    %790 = vrot.lane.b32.xlu0 %v787, 64
    %v791 = vpop.permute.xlu0 %790
    %v793 = vmul.f32 %v787, %v791
    %795 = vrot.lane.b32.xlu0 %v793, 32
    %v796 = vpop.permute.xlu0 %795
    %v798 = vadd.f32 %v788, %v796
    %v799 = vtanh.pop %v798
    %801 = vrot.lane.b32.xlu0 %v799, 64
    %v802 = vpop.permute.xlu0 %801
    %v804 = vmul.f32 %v787, %v802
    %v805 = vld [vmem:[#allocation2 + $0x8] sm:$0x3]
    %v806 = vpack.c.bf16 %v726, %v726
    %808 = vrot.lane.b32.xlu0 %v806, 32
    %v809 = vpop.permute.xlu0 %808
    %v811 = vsel %vm180, %v809, 0
    %813 = vmatprep.subr.bf16.mxu0 0
    %814 = vmatpush1.bf16.msra.mxu0 %v176
    %815 = vmatprep.subr.bf16.mxu0 0
    %816 = vmatpush1.bf16.msra.mxu0 %v177
    %817 = vmatprep.subr.bf16.mxu0 0
    %818 = vmatpush1.bf16.msra.mxu0 0
    %819 = vmatprep.subr.bf16.mxu0 0
    %820 = vmatpush1.bf16.msra.mxu0 0
    %821 = vmatprep.subr.bf16.mxu0 0
    %822 = vmatpush1.bf16.msra.mxu0 0
    %823 = vmatprep.subr.bf16.mxu0 0
    %824 = vmatpush1.bf16.msra.mxu0 0
    %825 = vmatprep.subr.bf16.mxu0 0
    %826 = vmatpush1.bf16.msra.mxu0 0
    %827 = vmatprep.subr.bf16.mxu0 0
    %828 = vmatpush1.bf16.msra.mxu0 0
    %829 = vmatprep.subr.bf16.mxu0 0
    %830 = vmatpush1.bf16.msra.mxu0 0
    %831 = vmatprep.subr.bf16.mxu0 0
    %832 = vmatpush1.bf16.msra.mxu0 0
    %833 = vmatprep.subr.bf16.mxu0 0
    %834 = vmatpush1.bf16.msra.mxu0 0
    %835 = vmatprep.subr.bf16.mxu0 0
    %836 = vmatpush1.bf16.msra.mxu0 0
    %837 = vmatprep.subr.bf16.mxu0 0
    %838 = vmatpush1.bf16.msra.mxu0 0
    %839 = vmatprep.subr.bf16.mxu0 0
    %840 = vmatpush1.bf16.msra.mxu0 0
    %841 = vmatprep.subr.bf16.mxu0 0
    %842 = vmatpush1.bf16.msra.mxu0 0
    %843 = vmatprep.subr.bf16.mxu0 0
    %844 = vmatpush1.bf16.msra.mxu0 0
    %845 = vmatprep.mubr.bf16.mxu0 0
    %846 = vmatmul.mubr.bf16.gmra.mrb[0].mxu0 %v811
    %v847 = vpop.f32.mrb[0].mxu0
    %v848 = vadd.f32 0.0, %v847
    %v849 = vpop.f32.mrb[0].mxu0
    %v850 = vpop.f32.mrb[0].mxu0
    %v851 = vpop.f32.mrb[0].mxu0
    %852 = vdwg.mxu0
    %v853 = vadd.f32 %v805, %v848
    %v854 = vtanh.pop %v853
    %v855 = vxor.u32 %v853, 2147483648
    %v856 = vmul.f32 %v855, 1.442695
    %v857 = vpow.pop %v856
    %v858 = vadd.f32 %v857, 1.0
    %v859 = vrcp.pop %v858
    %v860 = vmul.f32 1.0, %v859
    %v861 = vsel %vm166, %v854, %v860
    %v862 = vmul.f32 %v861, %v720
    %864 = vrot.lane.b32.xlu0 %v861, 64
    %v865 = vpop.permute.xlu0 %864
    %v867 = vmul.f32 %v861, %v865
    %869 = vrot.lane.b32.xlu0 %v867, 32
    %v870 = vpop.permute.xlu0 %869
    %v872 = vadd.f32 %v862, %v870
    %v873 = vtanh.pop %v872
    %875 = vrot.lane.b32.xlu0 %v873, 64
    %v876 = vpop.permute.xlu0 %875
    %v878 = vmul.f32 %v861, %v876
    %880 = vrot.lane.b32.xlu0 %v878, 32
    %v881 = vpop.permute.xlu0 %880
    %884 = vrot.lane.b32.xlu0 %v804, 64
    %v885 = vpop.permute.xlu0 %884
    %v887 = vsel %vm180, %v881, %v885
    %v888 = vpack.c.bf16 %v887, %v887
    %v890 = vsel %vm280, %v888, 0
    %892 = vmatprep.subr.bf16.mxu0 0
    %893 = vmatpush1.bf16.msra.mxu0 %v272
    %894 = vmatprep.subr.bf16.mxu0 0
    %895 = vmatpush1.bf16.msra.mxu0 %v273
    %896 = vmatprep.subr.bf16.mxu0 0
    %897 = vmatpush1.bf16.msra.mxu0 %v274
    %898 = vmatprep.subr.bf16.mxu0 0
    %899 = vmatpush1.bf16.msra.mxu0 %v275
    %900 = vmatprep.subr.bf16.mxu0 0
    %901 = vmatpush1.bf16.msra.mxu0 0
    %902 = vmatprep.subr.bf16.mxu0 0
    %903 = vmatpush1.bf16.msra.mxu0 0
    %904 = vmatprep.subr.bf16.mxu0 0
    %905 = vmatpush1.bf16.msra.mxu0 0
    %906 = vmatprep.subr.bf16.mxu0 0
    %907 = vmatpush1.bf16.msra.mxu0 0
    %908 = vmatprep.subr.bf16.mxu0 0
    %909 = vmatpush1.bf16.msra.mxu0 0
    %910 = vmatprep.subr.bf16.mxu0 0
    %911 = vmatpush1.bf16.msra.mxu0 0
    %912 = vmatprep.subr.bf16.mxu0 0
    %913 = vmatpush1.bf16.msra.mxu0 0
    %914 = vmatprep.subr.bf16.mxu0 0
    %915 = vmatpush1.bf16.msra.mxu0 0
    %916 = vmatprep.subr.bf16.mxu0 0
    %917 = vmatpush1.bf16.msra.mxu0 0
    %918 = vmatprep.subr.bf16.mxu0 0
    %919 = vmatpush1.bf16.msra.mxu0 0
    %920 = vmatprep.subr.bf16.mxu0 0
    %921 = vmatpush1.bf16.msra.mxu0 0
    %922 = vmatprep.subr.bf16.mxu0 0
    %923 = vmatpush1.bf16.msra.mxu0 0
    %924 = vmatprep.mubr.bf16.mxu0 0
    %925 = vmatmul.mubr.bf16.gmra.mrb[0].mxu0 %v890
    %v926 = vpop.f32.mrb[0].mxu0
    %v927 = vadd.f32 %v160, %v926
    %v928 = vpop.f32.mrb[0].mxu0
    %v929 = vpop.f32.mrb[0].mxu0
    %v930 = vpop.f32.mrb[0].mxu0
    %931 = vdwg.mxu0
    %v932 = vtanh.pop %v927
    %v933 = vxor.u32 %v927, 2147483648
    %v934 = vmul.f32 %v933, 1.442695
    %v935 = vpow.pop %v934
    %v936 = vadd.f32 %v935, 1.0
    %v937 = vrcp.pop %v936
    %v938 = vmul.f32 1.0, %v937
    %v939 = vsel %vm166, %v932, %v938
    %v940 = vmul.f32 %v939, %v798
    %942 = vrot.lane.b32.xlu0 %v939, 64
    %v943 = vpop.permute.xlu0 %942
    %v945 = vmul.f32 %v939, %v943
    %947 = vrot.lane.b32.xlu0 %v945, 32
    %v948 = vpop.permute.xlu0 %947
    %v950 = vadd.f32 %v940, %v948
    %v951 = vtanh.pop %v950
    %953 = vrot.lane.b32.xlu0 %v951, 64
    %v954 = vpop.permute.xlu0 %953
    %v956 = vmul.f32 %v939, %v954
    %v957 = vld [vmem:[#allocation2 + $0xa] sm:$0x3]
    %v958 = vpack.c.bf16 %v878, %v878
    %960 = vrot.lane.b32.xlu0 %v958, 32
    %v961 = vpop.permute.xlu0 %960
    %v963 = vsel %vm180, %v961, 0
    %965 = vmatprep.subr.bf16.mxu0 0
    %966 = vmatpush1.bf16.msra.mxu0 %v176
    %967 = vmatprep.subr.bf16.mxu0 0
    %968 = vmatpush1.bf16.msra.mxu0 %v177
    %969 = vmatprep.subr.bf16.mxu0 0
    %970 = vmatpush1.bf16.msra.mxu0 0
    %971 = vmatprep.subr.bf16.mxu0 0
    %972 = vmatpush1.bf16.msra.mxu0 0
    %973 = vmatprep.subr.bf16.mxu0 0
    %974 = vmatpush1.bf16.msra.mxu0 0
    %975 = vmatprep.subr.bf16.mxu0 0
    %976 = vmatpush1.bf16.msra.mxu0 0
    %977 = vmatprep.subr.bf16.mxu0 0
    %978 = vmatpush1.bf16.msra.mxu0 0
    %979 = vmatprep.subr.bf16.mxu0 0
    %980 = vmatpush1.bf16.msra.mxu0 0
    %981 = vmatprep.subr.bf16.mxu0 0
    %982 = vmatpush1.bf16.msra.mxu0 0
    %983 = vmatprep.subr.bf16.mxu0 0
    %984 = vmatpush1.bf16.msra.mxu0 0
    %985 = vmatprep.subr.bf16.mxu0 0
    %986 = vmatpush1.bf16.msra.mxu0 0
    %987 = vmatprep.subr.bf16.mxu0 0
    %988 = vmatpush1.bf16.msra.mxu0 0
    %989 = vmatprep.subr.bf16.mxu0 0
    %990 = vmatpush1.bf16.msra.mxu0 0
    %991 = vmatprep.subr.bf16.mxu0 0
    %992 = vmatpush1.bf16.msra.mxu0 0
    %993 = vmatprep.subr.bf16.mxu0 0
    %994 = vmatpush1.bf16.msra.mxu0 0
    %995 = vmatprep.subr.bf16.mxu0 0
    %996 = vmatpush1.bf16.msra.mxu0 0
    %997 = vmatprep.mubr.bf16.mxu0 0
    %998 = vmatmul.mubr.bf16.gmra.mrb[0].mxu0 %v963
    %v999 = vpop.f32.mrb[0].mxu0
    %v1000 = vadd.f32 0.0, %v999
    %v1001 = vpop.f32.mrb[0].mxu0
    %v1002 = vpop.f32.mrb[0].mxu0
    %v1003 = vpop.f32.mrb[0].mxu0
    %1004 = vdwg.mxu0
    %v1005 = vadd.f32 %v957, %v1000
    %v1006 = vtanh.pop %v1005
    %v1007 = vxor.u32 %v1005, 2147483648
    %v1008 = vmul.f32 %v1007, 1.442695
    %v1009 = vpow.pop %v1008
    %v1010 = vadd.f32 %v1009, 1.0
    %v1011 = vrcp.pop %v1010
    %v1012 = vmul.f32 1.0, %v1011
    %v1013 = vsel %vm166, %v1006, %v1012
    %v1014 = vmul.f32 %v1013, %v872
    %1016 = vrot.lane.b32.xlu0 %v1013, 64
    %v1017 = vpop.permute.xlu0 %1016
    %v1019 = vmul.f32 %v1013, %v1017
    %1021 = vrot.lane.b32.xlu0 %v1019, 32
    %v1022 = vpop.permute.xlu0 %1021
    %v1024 = vadd.f32 %v1014, %v1022
    %v1025 = vtanh.pop %v1024
    %1027 = vrot.lane.b32.xlu0 %v1025, 64
    %v1028 = vpop.permute.xlu0 %1027
    %v1030 = vmul.f32 %v1013, %v1028
    %1032 = vrot.lane.b32.xlu0 %v1030, 32
    %v1033 = vpop.permute.xlu0 %1032
    %1036 = vrot.lane.b32.xlu0 %v956, 64
    %v1037 = vpop.permute.xlu0 %1036
    %v1039 = vsel %vm180, %v1033, %v1037
    %v1040 = vpack.c.bf16 %v1039, %v1039
    %v1042 = vsel %vm280, %v1040, 0
    %1044 = vmatprep.subr.bf16.mxu0 0
    %1045 = vmatpush1.bf16.msra.mxu0 %v272
    %1046 = vmatprep.subr.bf16.mxu0 0
    %1047 = vmatpush1.bf16.msra.mxu0 %v273
    %1048 = vmatprep.subr.bf16.mxu0 0
    %1049 = vmatpush1.bf16.msra.mxu0 %v274
    %1050 = vmatprep.subr.bf16.mxu0 0
    %1051 = vmatpush1.bf16.msra.mxu0 %v275
    %1052 = vmatprep.subr.bf16.mxu0 0
    %1053 = vmatpush1.bf16.msra.mxu0 0
    %1054 = vmatprep.subr.bf16.mxu0 0
    %1055 = vmatpush1.bf16.msra.mxu0 0
    %1056 = vmatprep.subr.bf16.mxu0 0
    %1057 = vmatpush1.bf16.msra.mxu0 0
    %1058 = vmatprep.subr.bf16.mxu0 0
    %1059 = vmatpush1.bf16.msra.mxu0 0
    %1060 = vmatprep.subr.bf16.mxu0 0
    %1061 = vmatpush1.bf16.msra.mxu0 0
    %1062 = vmatprep.subr.bf16.mxu0 0
    %1063 = vmatpush1.bf16.msra.mxu0 0
    %1064 = vmatprep.subr.bf16.mxu0 0
    %1065 = vmatpush1.bf16.msra.mxu0 0
    %1066 = vmatprep.subr.bf16.mxu0 0
    %1067 = vmatpush1.bf16.msra.mxu0 0
    %1068 = vmatprep.subr.bf16.mxu0 0
    %1069 = vmatpush1.bf16.msra.mxu0 0
    %1070 = vmatprep.subr.bf16.mxu0 0
    %1071 = vmatpush1.bf16.msra.mxu0 0
    %1072 = vmatprep.subr.bf16.mxu0 0
    %1073 = vmatpush1.bf16.msra.mxu0 0
    %1074 = vmatprep.subr.bf16.mxu0 0
    %1075 = vmatpush1.bf16.msra.mxu0 0
    %1076 = vmatprep.mubr.bf16.mxu0 0
    %1077 = vmatmul.mubr.bf16.gmra.mrb[0].mxu0 %v1042
    %v1078 = vpop.f32.mrb[0].mxu0
    %v1079 = vadd.f32 %v160, %v1078
    %v1080 = vpop.f32.mrb[0].mxu0
    %v1081 = vpop.f32.mrb[0].mxu0
    %v1082 = vpop.f32.mrb[0].mxu0
    %1083 = vdwg.mxu0
    %v1084 = vtanh.pop %v1079
    %v1085 = vxor.u32 %v1079, 2147483648
    %v1086 = vmul.f32 %v1085, 1.442695
    %v1087 = vpow.pop %v1086
    %v1088 = vadd.f32 %v1087, 1.0
    %v1089 = vrcp.pop %v1088
    %v1090 = vmul.f32 1.0, %v1089
    %v1091 = vsel %vm166, %v1084, %v1090
    %v1092 = vmul.f32 %v1091, %v950
    %1094 = vrot.lane.b32.xlu0 %v1091, 64
    %v1095 = vpop.permute.xlu0 %1094
    %v1097 = vmul.f32 %v1091, %v1095
    %1099 = vrot.lane.b32.xlu0 %v1097, 32
    %v1100 = vpop.permute.xlu0 %1099
    %v1102 = vadd.f32 %v1092, %v1100
    %v1103 = vtanh.pop %v1102
    %1105 = vrot.lane.b32.xlu0 %v1103, 64
    %v1106 = vpop.permute.xlu0 %1105
    %v1108 = vmul.f32 %v1091, %v1106
    %v1109 = vld [vmem:[#allocation2 + $0xc] sm:$0x3]
    %v1110 = vpack.c.bf16 %v1030, %v1030
    %1112 = vrot.lane.b32.xlu0 %v1110, 32
    %v1113 = vpop.permute.xlu0 %1112
    %v1115 = vsel %vm180, %v1113, 0
    %1117 = vmatprep.subr.bf16.mxu0 0
    %1118 = vmatpush1.bf16.msra.mxu0 %v176
    %1119 = vmatprep.subr.bf16.mxu0 0
    %1120 = vmatpush1.bf16.msra.mxu0 %v177
    %1121 = vmatprep.subr.bf16.mxu0 0
    %1122 = vmatpush1.bf16.msra.mxu0 0
    %1123 = vmatprep.subr.bf16.mxu0 0
    %1124 = vmatpush1.bf16.msra.mxu0 0
    %1125 = vmatprep.subr.bf16.mxu0 0
    %1126 = vmatpush1.bf16.msra.mxu0 0
    %1127 = vmatprep.subr.bf16.mxu0 0
    %1128 = vmatpush1.bf16.msra.mxu0 0
    %1129 = vmatprep.subr.bf16.mxu0 0
    %1130 = vmatpush1.bf16.msra.mxu0 0
    %1131 = vmatprep.subr.bf16.mxu0 0
    %1132 = vmatpush1.bf16.msra.mxu0 0
    %1133 = vmatprep.subr.bf16.mxu0 0
    %1134 = vmatpush1.bf16.msra.mxu0 0
    %1135 = vmatprep.subr.bf16.mxu0 0
    %1136 = vmatpush1.bf16.msra.mxu0 0
    %1137 = vmatprep.subr.bf16.mxu0 0
    %1138 = vmatpush1.bf16.msra.mxu0 0
    %1139 = vmatprep.subr.bf16.mxu0 0
    %1140 = vmatpush1.bf16.msra.mxu0 0
    %1141 = vmatprep.subr.bf16.mxu0 0
    %1142 = vmatpush1.bf16.msra.mxu0 0
    %1143 = vmatprep.subr.bf16.mxu0 0
    %1144 = vmatpush1.bf16.msra.mxu0 0
    %1145 = vmatprep.subr.bf16.mxu0 0
    %1146 = vmatpush1.bf16.msra.mxu0 0
    %1147 = vmatprep.subr.bf16.mxu0 0
    %1148 = vmatpush1.bf16.msra.mxu0 0
    %1149 = vmatprep.mubr.bf16.mxu0 0
    %1150 = vmatmul.mubr.bf16.gmra.mrb[0].mxu0 %v1115
    %v1151 = vpop.f32.mrb[0].mxu0
    %v1152 = vadd.f32 0.0, %v1151
    %v1153 = vpop.f32.mrb[0].mxu0
    %v1154 = vpop.f32.mrb[0].mxu0
    %v1155 = vpop.f32.mrb[0].mxu0
    %1156 = vdwg.mxu0
    %v1157 = vadd.f32 %v1109, %v1152
    %v1158 = vtanh.pop %v1157
    %v1159 = vxor.u32 %v1157, 2147483648
    %v1160 = vmul.f32 %v1159, 1.442695
    %v1161 = vpow.pop %v1160
    %v1162 = vadd.f32 %v1161, 1.0
    %v1163 = vrcp.pop %v1162
    %v1164 = vmul.f32 1.0, %v1163
    %v1165 = vsel %vm166, %v1158, %v1164
    %v1166 = vmul.f32 %v1165, %v1024
    %1168 = vrot.lane.b32.xlu0 %v1165, 64
    %v1169 = vpop.permute.xlu0 %1168
    %v1171 = vmul.f32 %v1165, %v1169
    %1173 = vrot.lane.b32.xlu0 %v1171, 32
    %v1174 = vpop.permute.xlu0 %1173
    %v1176 = vadd.f32 %v1166, %v1174
    %v1177 = vtanh.pop %v1176
    %1179 = vrot.lane.b32.xlu0 %v1177, 64
    %v1180 = vpop.permute.xlu0 %1179
    %v1182 = vmul.f32 %v1165, %v1180
    %1184 = vrot.lane.b32.xlu0 %v1182, 32
    %v1185 = vpop.permute.xlu0 %1184
    %1188 = vrot.lane.b32.xlu0 %v1108, 64
    %v1189 = vpop.permute.xlu0 %1188
    %v1191 = vsel %vm180, %v1185, %v1189
    %v1192 = vpack.c.bf16 %v1191, %v1191
    %v1194 = vsel %vm280, %v1192, 0
    %1196 = vmatprep.subr.bf16.mxu0 0
    %1197 = vmatpush1.bf16.msra.mxu0 %v272
    %1198 = vmatprep.subr.bf16.mxu0 0
    %1199 = vmatpush1.bf16.msra.mxu0 %v273
    %1200 = vmatprep.subr.bf16.mxu0 0
    %1201 = vmatpush1.bf16.msra.mxu0 %v274
    %1202 = vmatprep.subr.bf16.mxu0 0
    %1203 = vmatpush1.bf16.msra.mxu0 %v275
    %1204 = vmatprep.subr.bf16.mxu0 0
    %1205 = vmatpush1.bf16.msra.mxu0 0
    %1206 = vmatprep.subr.bf16.mxu0 0
    %1207 = vmatpush1.bf16.msra.mxu0 0
    %1208 = vmatprep.subr.bf16.mxu0 0
    %1209 = vmatpush1.bf16.msra.mxu0 0
    %1210 = vmatprep.subr.bf16.mxu0 0
    %1211 = vmatpush1.bf16.msra.mxu0 0
    %1212 = vmatprep.subr.bf16.mxu0 0
    %1213 = vmatpush1.bf16.msra.mxu0 0
    %1214 = vmatprep.subr.bf16.mxu0 0
    %1215 = vmatpush1.bf16.msra.mxu0 0
    %1216 = vmatprep.subr.bf16.mxu0 0
    %1217 = vmatpush1.bf16.msra.mxu0 0
    %1218 = vmatprep.subr.bf16.mxu0 0
    %1219 = vmatpush1.bf16.msra.mxu0 0
    %1220 = vmatprep.subr.bf16.mxu0 0
    %1221 = vmatpush1.bf16.msra.mxu0 0
    %1222 = vmatprep.subr.bf16.mxu0 0
    %1223 = vmatpush1.bf16.msra.mxu0 0
    %1224 = vmatprep.subr.bf16.mxu0 0
    %1225 = vmatpush1.bf16.msra.mxu0 0
    %1226 = vmatprep.subr.bf16.mxu0 0
    %1227 = vmatpush1.bf16.msra.mxu0 0
    %1228 = vmatprep.mubr.bf16.mxu0 0
    %1229 = vmatmul.mubr.bf16.gmra.mrb[0].mxu0 %v1194
    %v1230 = vpop.f32.mrb[0].mxu0
    %v1231 = vadd.f32 %v160, %v1230
    %v1232 = vpop.f32.mrb[0].mxu0
    %v1233 = vpop.f32.mrb[0].mxu0
    %v1234 = vpop.f32.mrb[0].mxu0
    %1235 = vdwg.mxu0
    %v1236 = vtanh.pop %v1231
    %v1237 = vxor.u32 %v1231, 2147483648
    %v1238 = vmul.f32 %v1237, 1.442695
    %v1239 = vpow.pop %v1238
    %v1240 = vadd.f32 %v1239, 1.0
    %v1241 = vrcp.pop %v1240
    %v1242 = vmul.f32 1.0, %v1241
    %v1243 = vsel %vm166, %v1236, %v1242
    %v1244 = vmul.f32 %v1243, %v1102
    %1246 = vrot.lane.b32.xlu0 %v1243, 64
    %v1247 = vpop.permute.xlu0 %1246
    %v1249 = vmul.f32 %v1243, %v1247
    %1251 = vrot.lane.b32.xlu0 %v1249, 32
    %v1252 = vpop.permute.xlu0 %1251
    %v1254 = vadd.f32 %v1244, %v1252
    %v1255 = vtanh.pop %v1254
    %1257 = vrot.lane.b32.xlu0 %v1255, 64
    %v1258 = vpop.permute.xlu0 %1257
    %v1260 = vmul.f32 %v1243, %v1258
    %v1261 = vld [vmem:[#allocation2 + $0xe] sm:$0x3]
    %v1262 = vpack.c.bf16 %v1182, %v1182
    %1264 = vrot.lane.b32.xlu0 %v1262, 32
    %v1265 = vpop.permute.xlu0 %1264
    %v1267 = vsel %vm180, %v1265, 0
    %1269 = vmatprep.subr.bf16.mxu0 0
    %1270 = vmatpush1.bf16.msra.mxu0 %v176
    %1271 = vmatprep.subr.bf16.mxu0 0
    %1272 = vmatpush1.bf16.msra.mxu0 %v177
    %1273 = vmatprep.subr.bf16.mxu0 0
    %1274 = vmatpush1.bf16.msra.mxu0 0
    %1275 = vmatprep.subr.bf16.mxu0 0
    %1276 = vmatpush1.bf16.msra.mxu0 0
    %1277 = vmatprep.subr.bf16.mxu0 0
    %1278 = vmatpush1.bf16.msra.mxu0 0
    %1279 = vmatprep.subr.bf16.mxu0 0
    %1280 = vmatpush1.bf16.msra.mxu0 0
    %1281 = vmatprep.subr.bf16.mxu0 0
    %1282 = vmatpush1.bf16.msra.mxu0 0
    %1283 = vmatprep.subr.bf16.mxu0 0
    %1284 = vmatpush1.bf16.msra.mxu0 0
    %1285 = vmatprep.subr.bf16.mxu0 0
    %1286 = vmatpush1.bf16.msra.mxu0 0
    %1287 = vmatprep.subr.bf16.mxu0 0
    %1288 = vmatpush1.bf16.msra.mxu0 0
    %1289 = vmatprep.subr.bf16.mxu0 0
    %1290 = vmatpush1.bf16.msra.mxu0 0
    %1291 = vmatprep.subr.bf16.mxu0 0
    %1292 = vmatpush1.bf16.msra.mxu0 0
    %1293 = vmatprep.subr.bf16.mxu0 0
    %1294 = vmatpush1.bf16.msra.mxu0 0
    %1295 = vmatprep.subr.bf16.mxu0 0
    %1296 = vmatpush1.bf16.msra.mxu0 0
    %1297 = vmatprep.subr.bf16.mxu0 0
    %1298 = vmatpush1.bf16.msra.mxu0 0
    %1299 = vmatprep.subr.bf16.mxu0 0
    %1300 = vmatpush1.bf16.msra.mxu0 0
    %1301 = vmatprep.mubr.bf16.mxu0 0
    %1302 = vmatmul.mubr.bf16.gmra.mrb[0].mxu0 %v1267
    %v1303 = vpop.f32.mrb[0].mxu0
    %v1304 = vadd.f32 0.0, %v1303
    %v1305 = vpop.f32.mrb[0].mxu0
    %v1306 = vpop.f32.mrb[0].mxu0
    %v1307 = vpop.f32.mrb[0].mxu0
    %1308 = vdwg.mxu0
    %v1309 = vadd.f32 %v1261, %v1304
    %v1310 = vtanh.pop %v1309
    %v1311 = vxor.u32 %v1309, 2147483648
    %v1312 = vmul.f32 %v1311, 1.442695
    %v1313 = vpow.pop %v1312
    %v1314 = vadd.f32 %v1313, 1.0
    %v1315 = vrcp.pop %v1314
    %v1316 = vmul.f32 1.0, %v1315
    %v1317 = vsel %vm166, %v1310, %v1316
    %v1318 = vmul.f32 %v1317, %v1176
    %1320 = vrot.lane.b32.xlu0 %v1317, 64
    %v1321 = vpop.permute.xlu0 %1320
    %v1323 = vmul.f32 %v1317, %v1321
    %1325 = vrot.lane.b32.xlu0 %v1323, 32
    %v1326 = vpop.permute.xlu0 %1325
    %v1328 = vadd.f32 %v1318, %v1326
    %v1329 = vtanh.pop %v1328
    %1331 = vrot.lane.b32.xlu0 %v1329, 64
    %v1332 = vpop.permute.xlu0 %1331
    %v1334 = vmul.f32 %v1317, %v1332
    %1336 = vrot.lane.b32.xlu0 %v1334, 32
    %v1337 = vpop.permute.xlu0 %1336
    %1340 = vrot.lane.b32.xlu0 %v1260, 64
    %v1341 = vpop.permute.xlu0 %1340
    %v1343 = vsel %vm180, %v1337, %v1341
    %v1344 = vpack.c.bf16 %v1343, %v1343
    %v1346 = vsel %vm280, %v1344, 0
    %1348 = vmatprep.subr.bf16.mxu0 0
    %1349 = vmatpush1.bf16.msra.mxu0 %v272
    %1350 = vmatprep.subr.bf16.mxu0 0
    %1351 = vmatpush1.bf16.msra.mxu0 %v273
    %1352 = vmatprep.subr.bf16.mxu0 0
    %1353 = vmatpush1.bf16.msra.mxu0 %v274
    %1354 = vmatprep.subr.bf16.mxu0 0
    %1355 = vmatpush1.bf16.msra.mxu0 %v275
    %1356 = vmatprep.subr.bf16.mxu0 0
    %1357 = vmatpush1.bf16.msra.mxu0 0
    %1358 = vmatprep.subr.bf16.mxu0 0
    %1359 = vmatpush1.bf16.msra.mxu0 0
    %1360 = vmatprep.subr.bf16.mxu0 0
    %1361 = vmatpush1.bf16.msra.mxu0 0
    %1362 = vmatprep.subr.bf16.mxu0 0
    %1363 = vmatpush1.bf16.msra.mxu0 0
    %1364 = vmatprep.subr.bf16.mxu0 0
    %1365 = vmatpush1.bf16.msra.mxu0 0
    %1366 = vmatprep.subr.bf16.mxu0 0
    %1367 = vmatpush1.bf16.msra.mxu0 0
    %1368 = vmatprep.subr.bf16.mxu0 0
    %1369 = vmatpush1.bf16.msra.mxu0 0
    %1370 = vmatprep.subr.bf16.mxu0 0
    %1371 = vmatpush1.bf16.msra.mxu0 0
    %1372 = vmatprep.subr.bf16.mxu0 0
    %1373 = vmatpush1.bf16.msra.mxu0 0
    %1374 = vmatprep.subr.bf16.mxu0 0
    %1375 = vmatpush1.bf16.msra.mxu0 0
    %1376 = vmatprep.subr.bf16.mxu0 0
    %1377 = vmatpush1.bf16.msra.mxu0 0
    %1378 = vmatprep.subr.bf16.mxu0 0
    %1379 = vmatpush1.bf16.msra.mxu0 0
    %1380 = vmatprep.mubr.bf16.mxu0 0
    %1381 = vmatmul.mubr.bf16.gmra.mrb[0].mxu0 %v1346
    %v1382 = vpop.f32.mrb[0].mxu0
    %v1383 = vadd.f32 %v160, %v1382
    %v1384 = vpop.f32.mrb[0].mxu0
    %v1385 = vpop.f32.mrb[0].mxu0
    %v1386 = vpop.f32.mrb[0].mxu0
    %1387 = vdwg.mxu0
    %v1388 = vtanh.pop %v1383
    %v1389 = vxor.u32 %v1383, 2147483648
    %v1390 = vmul.f32 %v1389, 1.442695
    %v1391 = vpow.pop %v1390
    %v1392 = vadd.f32 %v1391, 1.0
    %v1393 = vrcp.pop %v1392
    %v1394 = vmul.f32 1.0, %v1393
    %v1395 = vsel %vm166, %v1388, %v1394
    %v1396 = vmul.f32 %v1395, %v1254
    %1398 = vrot.lane.b32.xlu0 %v1395, 64
    %v1399 = vpop.permute.xlu0 %1398
    %v1401 = vmul.f32 %v1395, %v1399
    %1403 = vrot.lane.b32.xlu0 %v1401, 32
    %v1404 = vpop.permute.xlu0 %1403
    %v1406 = vadd.f32 %v1396, %v1404
    %v1407 = vtanh.pop %v1406
    %1409 = vrot.lane.b32.xlu0 %v1407, 64
    %v1410 = vpop.permute.xlu0 %1409
    %v1412 = vmul.f32 %v1395, %v1410
    %v1413 = vpack.c.bf16 %v1412, %v1412
    %v1414 = vld [vmem:[#allocation8] sm:$0x1]
    %v1416 = vlaneseq
    %v1417 = vshrl.u32 %v1416, 7
    %v1418 = vsub.s32 0, %v1417
    %v1419 = vrot.slane %v1414, %v1418
    %1422 = vrot.lane.b32.xlu0 %v1413, 32
    %v1423 = vpop.permute.xlu0 %1422
    %v1428 = vunpack.c.l.b16 %v82
    %v1429 = vunpack.c.l.b16 %v83
    %v1430 = vunpack.c.l.b16 %v84
    %v1431 = vunpack.c.l.b16 %v85
    %v1432 = vpack.c.b16 %v1429, %v1428
    %v1433 = vpack.c.b16 %v1431, %v1430
    %v1437 = vsel %vm180, %v1423, 0
    %1439 = vmatprep.subr.bf16.mxu0 0
    %1440 = vmatpush1.bf16.msra.mxu0 %v1432
    %1441 = vmatprep.subr.bf16.mxu0 0
    %1442 = vmatpush1.bf16.msra.mxu0 %v1433
    %1443 = vmatprep.subr.bf16.mxu0 0
    %1444 = vmatpush1.bf16.msra.mxu0 0
    %1445 = vmatprep.subr.bf16.mxu0 0
    %1446 = vmatpush1.bf16.msra.mxu0 0
    %1447 = vmatprep.subr.bf16.mxu0 0
    %1448 = vmatpush1.bf16.msra.mxu0 0
    %1449 = vmatprep.subr.bf16.mxu0 0
    %1450 = vmatpush1.bf16.msra.mxu0 0
    %1451 = vmatprep.subr.bf16.mxu0 0
    %1452 = vmatpush1.bf16.msra.mxu0 0
    %1453 = vmatprep.subr.bf16.mxu0 0
    %1454 = vmatpush1.bf16.msra.mxu0 0
    %1455 = vmatprep.subr.bf16.mxu0 0
    %1456 = vmatpush1.bf16.msra.mxu0 0
    %1457 = vmatprep.subr.bf16.mxu0 0
    %1458 = vmatpush1.bf16.msra.mxu0 0
    %1459 = vmatprep.subr.bf16.mxu0 0
    %1460 = vmatpush1.bf16.msra.mxu0 0
    %1461 = vmatprep.subr.bf16.mxu0 0
    %1462 = vmatpush1.bf16.msra.mxu0 0
    %1463 = vmatprep.subr.bf16.mxu0 0
    %1464 = vmatpush1.bf16.msra.mxu0 0
    %1465 = vmatprep.subr.bf16.mxu0 0
    %1466 = vmatpush1.bf16.msra.mxu0 0
    %1467 = vmatprep.subr.bf16.mxu0 0
    %1468 = vmatpush1.bf16.msra.mxu0 0
    %1469 = vmatprep.subr.bf16.mxu0 0
    %1470 = vmatpush1.bf16.msra.mxu0 0
    %1471 = vmatprep.mubr.bf16.mxu0 0
    %1472 = vmatmul.mubr.bf16.gmra.mrb[0].mxu0 %v1437
    %v1473 = vpop.f32.mrb[0].mxu0
    %v1474 = vadd.f32 %v1419, %v1473
    %v1475 = vpop.f32.mrb[0].mxu0
    %v1476 = vpop.f32.mrb[0].mxu0
    %v1477 = vpop.f32.mrb[0].mxu0
    %1478 = vdwg.mxu0
    %vm1479 = vcmask 1041408
    %v1480 = vsel %vm1479, %v1474, -inf
    %1481 = vmax.xlane.f32.xlu0 %v1480
    %v1482 = vpop.xlane.xlu0 %1481
    %v1483 = vsub.f32 %v1474, %v1482
    %v1484 = vmul.f32 %v1483, 1.442695
    %v1485 = vpow.pop %v1484
    %v1486 = vsel %vm1479, %v1485, 0.0
    %1487 = vadd.xlane.f32.xlu0 %v1486
    %v1488 = vpop.xlane.xlu0 %1487
    %v1489 = vrcp.pop %v1488
    %v1490 = vmul.f32 %v1485, %v1489
    %1491 = vst [vmem:[#allocation9] sm:$0x3] %v1490
    // Predicated region
    $region46: #{deeplog_forward.1} parent=1 // pred_check
      _
    $region47: #{deeplog_forward.1} parent=1 // pred_check_branch
      %1493 = sbr.rel (0) target = $region49
    $region48: #{deeplog_forward.1} parent=1 // pred_region
      %s1495 = ssub.s32 32, 32
      %1496 = vsyncadd [#allocation5], %s1495
      %s1498 = sshll.u32 [#allocation9], 4
      %s1499 = int_to_ptr.vmem [resolvable:$true] %s1498
      %1501 = dma.vmem_to_hbm [thread:$0]  %s1499, 32, %s8, [#allocation5]
    $region49: #{deeplog_forward.1} parent=1 // pred_fallthru
      _
    // Predicated region
    $region50: #{deeplog_forward.1} parent=1 // pred_check
      _
    $region51: #{deeplog_forward.1} parent=1 // pred_check_branch
      %1503 = sbr.rel (0) target = $region53
    $region52: #{deeplog_forward.1} parent=1 // pred_region
      %1504 = dma.done [#allocation5], 32
    $region53: #{deeplog_forward.1} parent=1 // pred_fallthru
      _
    %1505 = vsyncpa [#allocation4], 1
    %1506 = vsyncpa [#allocation7], 1
    %1507 = vsyncpa [#allocation5], 1

</llo_original>
